<compile_context>
chip_gen: v5e
topology: v5e:2x2
jax: 0.10.0
libtpu: 0.0.40
codegen_flags: <defaults>
</compile_context>

<pallas_src>
import functools

import jax
import jax.numpy as jnp
from jax import lax
from jax.experimental import pallas as pl
from jax.experimental.pallas import tpu as pltpu


# ----------------------------------------------------------------------------
# Feature probe: is BlockSpec(pipeline_mode=pl.Buffered(1)) supported?
# ----------------------------------------------------------------------------
def _probe_single_buffered():
    try:
        def _k(x_ref, o_ref):
            o_ref[...] = x_ref[...] + 1.0

        f = pl.pallas_call(
            _k,
            grid=(2,),
            in_specs=[pl.BlockSpec((8, 128), lambda i: (0, 0),
                                   pipeline_mode=pl.Buffered(1))],
            out_specs=pl.BlockSpec((8, 128), lambda i: (i, 0)),
            out_shape=jax.ShapeDtypeStruct((16, 128), jnp.float32),
        )
        res = jax.block_until_ready(f(jnp.zeros((8, 128), jnp.float32)))
        return bool(jnp.all(res == 1.0))
    except Exception:
        return False


_SINGLE_BUFFER_OK = _probe_single_buffered()


# ----------------------------------------------------------------------------
# Pallas kernel: fused  (patches @ W) + bias  [+ LeakyReLU(0.2)]
# ----------------------------------------------------------------------------
def _fused_conv_kernel(p_ref, w_ref, b_ref, o_ref, *, neg_slope, apply_act):
    # bf16 x bf16 -> f32 accumulation on the MXU.
    y = jnp.dot(p_ref[...], w_ref[...], preferred_element_type=jnp.float32)
    y = y + b_ref[...]                    # (1, tile_n) broadcast, f32 epilogue
    if apply_act:
        y = jnp.where(y > 0, y, neg_slope * y)
    o_ref[...] = y.astype(o_ref.dtype)


def _round_up(x, m):
    return ((x + m - 1) // m) * m


def fused_conv_gemm(patches, w, bias, *, neg_slope=0.2, apply_act=True,
                    out_dtype=jnp.float32, tile_m=512, max_tile_n=256):
    """patches: (M, K), w: (K, N), bias: (N,) -> (M, N) in out_dtype."""
    m, k = patches.shape
    n = w.shape[1]

    patches = patches.astype(jnp.bfloat16)
    w = w.astype(jnp.bfloat16)
    bias2d = bias.astype(jnp.float32).reshape(1, n)

    # M tile: as large as possible (per-grid-step overhead dominates small
    # tiles), clamped to the actual row count.
    tm = min(tile_m, _round_up(m, 8))
    # N tile: split very wide layers so the weight slab stays small and the
    # grid has more parallel work for megacore.
    tn = max_tile_n if (n > max_tile_n and n % max_tile_n == 0) else n
    grid = (pl.cdiv(n, tn), pl.cdiv(m, tm))          # N outer, M inner (fast)

    # Weight/bias never change across the fast M axis; with a single N tile
    # they are fully invariant -> single-buffer them to save VMEM.
    invariant = (grid[0] == 1) and _SINGLE_BUFFER_OK

    def _spec(shape, index_map, single_buffer):
        if single_buffer:
            return pl.BlockSpec(shape, index_map, pipeline_mode=pl.Buffered(1))
        return pl.BlockSpec(shape, index_map)

    w_bufs = 1 if invariant else 2
    est_vmem = (2 * tm * k * 2            # patches: bf16, double-buffered
                + w_bufs * k * tn * 2     # weights: bf16
                + 2 * tm * tn * 4         # output:  f32 worst case
                + 2 * tn * 4)             # bias
    vmem_limit = min(max(int(est_vmem * 1.5) + (4 << 20), 32 << 20), 48 << 20)

    kernel = functools.partial(_fused_conv_kernel,
                               neg_slope=neg_slope, apply_act=apply_act)
    return pl.pallas_call(
        kernel,
        grid=grid,
        in_specs=[
            pl.BlockSpec((tm, k), lambda jn, im: (im, 0)),
            _spec((k, tn), lambda jn, im: (0, jn), invariant),
            _spec((1, tn), lambda jn, im: (0, jn), invariant),
        ],
        out_specs=pl.BlockSpec((tm, tn), lambda jn, im: (im, jn)),
        out_shape=jax.ShapeDtypeStruct((m, n), out_dtype),
        compiler_params=pltpu.CompilerParams(
            dimension_semantics=("parallel", "parallel"),
            vmem_limit_bytes=vmem_limit),
    )(patches, w, bias2d)


# ----------------------------------------------------------------------------
# Plain-JAX glue: im2col patch extraction (NHWC)
# ----------------------------------------------------------------------------
def im2col(x_nhwc, kh, kw, stride, pad):
    n, h, w, c = x_nhwc.shape
    xp = jnp.pad(x_nhwc, ((0, 0), (pad, pad), (pad, pad), (0, 0)))
    ho = (h + 2 * pad - kh) // stride + 1
    wo = (w + 2 * pad - kw) // stride + 1
    cols = []
    for i in range(kh):
        for j in range(kw):
            cols.append(xp[:,
                           i:i + (ho - 1) * stride + 1:stride,
                           j:j + (wo - 1) * stride + 1:stride, :])
    patches = jnp.stack(cols, axis=3)                 # (n, ho, wo, kh*kw, c)
    return patches.reshape(n * ho * wo, kh * kw * c), (n, ho, wo)


# ----------------------------------------------------------------------------
# Parameters (deterministic synthetic init, PyTorch shapes)
# ----------------------------------------------------------------------------
def make_conv_params(key, cin, cout, kh, kw, with_bn):
    k1, k2, k3, k4, k5, k6 = jax.random.split(key, 6)
    p = {
        "w": 0.05 * jax.random.normal(k1, (cout, cin, kh, kw), jnp.float32),
        "b": 0.05 * jax.random.normal(k2, (cout,), jnp.float32),
        "gamma": None, "beta": None, "mean": None, "var": None,
    }
    if with_bn:
        p["gamma"] = 1.0 + 0.1 * jax.random.normal(k3, (cout,), jnp.float32)
        p["beta"] = 0.1 * jax.random.normal(k4, (cout,), jnp.float32)
        p["mean"] = 0.1 * jax.random.normal(k5, (cout,), jnp.float32)
        p["var"] = jnp.abs(jax.random.normal(k6, (cout,), jnp.float32)) + 0.5
    return p


def init_discriminator(key, in_ch=3, ndf=64, n_layers=4):
    keys = jax.random.split(key, n_layers + 1)
    params = [make_conv_params(keys[0], in_ch, ndf, 4, 4, with_bn=False)]
    c = ndf
    for i in range(1, n_layers):
        params.append(make_conv_params(keys[i], c, 2 * c, 4, 4, with_bn=True))
        c *= 2
    params.append(make_conv_params(keys[n_layers], c, 1, 3, 3, with_bn=False))
    return params


def fold_params(p, eps=1e-5):
    """Fold conv bias + inference BN into (w_gemm, bias); scale goes into W."""
    cout, cin, kh, kw = p["w"].shape
    w_gemm = jnp.transpose(p["w"], (2, 3, 1, 0)).reshape(kh * kw * cin, cout)
    if p["gamma"] is not None:
        scale = p["gamma"] / jnp.sqrt(p["var"] + eps)
        bias = p["beta"] + scale * (p["b"] - p["mean"])
        w_gemm = w_gemm * scale[None, :]
    else:
        bias = p["b"]
    return w_gemm, bias


# ----------------------------------------------------------------------------
# Forward passes
# ----------------------------------------------------------------------------
def discriminator_forward(x_nchw, params):
    # NHWC, bf16 activations between layers (identical to the per-layer cast
    # the GEMM would do anyway, but halves the im2col / activation HBM bytes).
    x = jnp.transpose(x_nchw, (0, 2, 3, 1)).astype(jnp.bfloat16)

    # Hidden layers: 4x4, stride 2, pad 1, (BN,) LeakyReLU(0.2).
    # (First layer K = 4*4*in_ch = 48 is left un-padded: padding K to 128
    #  would add HBM traffic to an already mem-bound layer.)
    for p in params[:-1]:
        w_gemm, bias = fold_params(p)
        kh, kw = p["w"].shape[2], p["w"].shape[3]
        patches, (n, ho, wo) = im2col(x, kh, kw, stride=2, pad=1)
        y = fused_conv_gemm(patches, w_gemm, bias, apply_act=True,
                            out_dtype=jnp.bfloat16)
        x = y.reshape(n, ho, wo, w_gemm.shape[1])

    # Final layer: 3x3, stride 1, pad 1, Cout=1, no activation.  Pad Cout
    # 1 -> 128 with zero weights/bias so the GEMM output stays lane-dense
    # (avoids the N=1 masked-store path); slice channel 0 afterwards (tiny).
    p = params[-1]
    w_gemm, bias = fold_params(p)
    lane_pad = 128 - w_gemm.shape[1]
    w_gemm = jnp.pad(w_gemm, ((0, 0), (0, lane_pad)))
    bias = jnp.pad(bias, (0, lane_pad))
    patches, (n, ho, wo) = im2col(x, 3, 3, stride=1, pad=1)
    y = fused_conv_gemm(patches, w_gemm, bias, apply_act=False,
                        out_dtype=jnp.float32)
    x = y[:, :1].reshape(n, ho, wo, 1)
    return jnp.transpose(x, (0, 3, 1, 2)).astype(jnp.float32)       # -> NCHW


def reference_forward(x_nchw, params, eps=1e-5):
    x = x_nchw
    for i, p in enumerate(params):
        is_last = i == len(params) - 1
        stride = 1 if is_last else 2
        x = lax.conv_general_dilated(
            x, p["w"], (stride, stride), [(1, 1), (1, 1)],
            dimension_numbers=("NCHW", "OIHW", "NCHW"))
        x = x + p["b"][None, :, None, None]
        if p["gamma"] is not None:
            s = p["gamma"] / jnp.sqrt(p["var"] + eps)
            x = (x - p["mean"][None, :, None, None]) * s[None, :, None, None] \
                + p["beta"][None, :, None, None]
        if not is_last:
            x = jnp.where(x > 0, x, 0.2 * x)
    return x


# ----------------------------------------------------------------------------
if __name__ == "__main__":
    key = jax.random.PRNGKey(0)
    k_x, k_p = jax.random.split(key)

    # Small shapes consistent with the module: in_ch=3, ndf=16, n_layers=4.
    x = jax.random.normal(k_x, (2, 3, 32, 32), jnp.float32)
    params = init_discriminator(k_p, in_ch=3, ndf=16, n_layers=4)

    out = jax.jit(discriminator_forward)(x, params)
    out = jax.block_until_ready(out)              # expected shape (2, 1, 2, 2)

    ref = jax.block_until_ready(reference_forward(x, params))
    assert out.shape == ref.shape == (2, 1, 2, 2), (out.shape, ref.shape)
    max_err = float(jnp.max(jnp.abs(out - ref)))
    # bf16 GEMM operands (f32 accumulation) -> looser tolerance than pure f32.
    assert jnp.allclose(out, ref, atol=5e-2, rtol=5e-2), max_err

    print("KERNEL_OK")
</pallas_src>

<mosaic_0001>
module attributes {stable_mosaic.version = 11 : i64} {
  func.func @_k(%arg0: i32, %arg1: memref<8x128xf32, #tpu.memory_space<vmem>>, %arg2: memref<8x128xf32, #tpu.memory_space<vmem>>) attributes {dimension_semantics = [#tpu.dimension_semantics<arbitrary>], iteration_bounds = array<i64: 2>, scalar_prefetch = 0 : i64, scratch_operands = 0 : i64, tpu.core_type = #tpu.core_type<tc>, window_params = [{pipeline_mode = #tpu.pipeline_mode<synchronous>, transform_indices = @transform_0, window_bounds = array<i64: 8, 128>}, {transform_indices = @transform_1, window_bounds = array<i64: 8, 128>}]} {
    %c0 = arith.constant 0 : index
    %c0_0 = arith.constant 0 : index
    %0 = vector.load %arg1[%c0, %c0_0] : memref<8x128xf32, #tpu.memory_space<vmem>>, vector<8x128xf32>
    %cst = arith.constant 1.000000e+00 : f32
    %1 = vector.broadcast %cst : f32 to vector<8x128xf32>
    %2 = arith.addf %0, %1 : vector<8x128xf32>
    %c0_1 = arith.constant 0 : index
    %c0_2 = arith.constant 0 : index
    %3 = vector.load %arg2[%c0_1, %c0_2] : memref<8x128xf32, #tpu.memory_space<vmem>>, vector<8x128xf32>
    tpu.vector_store %arg2[%c0_1, %c0_2], %2 {strides = array<i32>} : memref<8x128xf32, #tpu.memory_space<vmem>>, vector<8x128xf32>,
    return
  }
  func.func @transform_0(%arg0: i32) -> (i32, i32) {
    %c0_i32 = arith.constant 0 : i32
    %c0_i32_0 = arith.constant 0 : i32
    %c0_i32_1 = arith.constant 0 : i32
    return %c0_i32, %c0_i32_0 : i32, i32
  }
  func.func @transform_1(%arg0: i32) -> (i32, i32) {
    %c0_i32 = arith.constant 0 : i32
    %c0_i32_0 = arith.constant 0 : i32
    return %arg0, %c0_i32 : i32, i32
  }
}

module attributes {stable_mosaic.version = 11 : i64} {
  func.func @_fused_conv_kernel(%arg0: i32, %arg1: i32, %arg2: memref<512x48xbf16, #tpu.memory_space<vmem>>, %arg3: memref<48x16xbf16, #tpu.memory_space<vmem>>, %arg4: memref<1x16xf32, #tpu.memory_space<vmem>>, %arg5: memref<512x16xbf16, #tpu.memory_space<vmem>>) attributes {dimension_semantics = [#tpu.dimension_semantics<parallel>, #tpu.dimension_semantics<parallel>], iteration_bounds = array<i64: 1, 1>, scalar_prefetch = 0 : i64, scratch_operands = 0 : i64, tpu.core_type = #tpu.core_type<tc>, window_params = [{transform_indices = @transform_0, window_bounds = array<i64: 512, 48>}, {transform_indices = @transform_1, window_bounds = array<i64: 48, 16>}, {transform_indices = @transform_2, window_bounds = array<i64: 1, 16>}, {transform_indices = @transform_3, window_bounds = array<i64: 512, 16>}]} {
    %c0 = arith.constant 0 : index
    %c0_0 = arith.constant 0 : index
    %0 = vector.load %arg2[%c0, %c0_0] : memref<512x48xbf16, #tpu.memory_space<vmem>>, vector<512x48xbf16>
    %c0_1 = arith.constant 0 : index
    %c0_2 = arith.constant 0 : index
    %1 = vector.load %arg3[%c0_1, %c0_2] : memref<48x16xbf16, #tpu.memory_space<vmem>>, vector<48x16xbf16>
    %cst = arith.constant dense<0.000000e+00> : vector<512x16xf32>
    %2 = tpu.matmul %0, %1, %cst {dimension_numbers = #tpu.dot_dimension_numbers<[1], [0], [0], [1], [0, 0, 1, 1], [], []>} : vector<512x48xbf16>, vector<48x16xbf16>, vector<512x16xf32> -> vector<512x16xf32>
    %c0_3 = arith.constant 0 : index
    %c0_4 = arith.constant 0 : index
    %3 = vector.load %arg4[%c0_3, %c0_4] : memref<1x16xf32, #tpu.memory_space<vmem>>, vector<1x16xf32>
    %4 = vector.broadcast %3 : vector<1x16xf32> to vector<512x16xf32>
    %5 = arith.addf %2, %4 : vector<512x16xf32>
    %cst_5 = arith.constant 0.000000e+00 : f32
    %6 = vector.broadcast %cst_5 : f32 to vector<512x16xf32>
    %7 = arith.cmpf ogt, %5, %6 : vector<512x16xf32>
    %cst_6 = arith.constant 2.000000e-01 : f32
    %8 = vector.broadcast %cst_6 : f32 to vector<512x16xf32>
    %9 = arith.mulf %8, %5 : vector<512x16xf32>
    %10 = arith.select %7, %5, %9 : vector<512x16xi1>, vector<512x16xf32>
    %11 = arith.truncf %10 : vector<512x16xf32> to vector<512x16xbf16>
    %c0_7 = arith.constant 0 : index
    %c0_8 = arith.constant 0 : index
    %12 = vector.load %arg5[%c0_7, %c0_8] : memref<512x16xbf16, #tpu.memory_space<vmem>>, vector<512x16xbf16>
    tpu.vector_store %arg5[%c0_7, %c0_8], %11 {strides = array<i32>} : memref<512x16xbf16, #tpu.memory_space<vmem>>, vector<512x16xbf16>,
    return
  }
  func.func @transform_0(%arg0: i32, %arg1: i32) -> (i32, i32) {
    %c0_i32 = arith.constant 0 : i32
    %c0_i32_0 = arith.constant 0 : i32
    return %arg1, %c0_i32 : i32, i32
  }
  func.func @transform_1(%arg0: i32, %arg1: i32) -> (i32, i32) {
    %c0_i32 = arith.constant 0 : i32
    %c0_i32_0 = arith.constant 0 : i32
    return %c0_i32, %arg0 : i32, i32
  }
  func.func @transform_2(%arg0: i32, %arg1: i32) -> (i32, i32) {
    %c0_i32 = arith.constant 0 : i32
    %c0_i32_0 = arith.constant 0 : i32
    return %c0_i32, %arg0 : i32, i32
  }
  func.func @transform_3(%arg0: i32, %arg1: i32) -> (i32, i32) {
    %c0_i32 = arith.constant 0 : i32
    return %arg1, %arg0 : i32, i32
  }
}

module attributes {stable_mosaic.version = 11 : i64} {
  func.func @_fused_conv_kernel(%arg0: i32, %arg1: i32, %arg2: memref<128x256xbf16, #tpu.memory_space<vmem>>, %arg3: memref<256x32xbf16, #tpu.memory_space<vmem>>, %arg4: memref<1x32xf32, #tpu.memory_space<vmem>>, %arg5: memref<128x32xbf16, #tpu.memory_space<vmem>>) attributes {dimension_semantics = [#tpu.dimension_semantics<parallel>, #tpu.dimension_semantics<parallel>], iteration_bounds = array<i64: 1, 1>, scalar_prefetch = 0 : i64, scratch_operands = 0 : i64, tpu.core_type = #tpu.core_type<tc>, window_params = [{transform_indices = @transform_0, window_bounds = array<i64: 128, 256>}, {transform_indices = @transform_1, window_bounds = array<i64: 256, 32>}, {transform_indices = @transform_2, window_bounds = array<i64: 1, 32>}, {transform_indices = @transform_3, window_bounds = array<i64: 128, 32>}]} {
    %c0 = arith.constant 0 : index
    %c0_0 = arith.constant 0 : index
    %0 = vector.load %arg2[%c0, %c0_0] : memref<128x256xbf16, #tpu.memory_space<vmem>>, vector<128x256xbf16>
    %c0_1 = arith.constant 0 : index
    %c0_2 = arith.constant 0 : index
    %1 = vector.load %arg3[%c0_1, %c0_2] : memref<256x32xbf16, #tpu.memory_space<vmem>>, vector<256x32xbf16>
    %cst = arith.constant dense<0.000000e+00> : vector<128x32xf32>
    %2 = tpu.matmul %0, %1, %cst {dimension_numbers = #tpu.dot_dimension_numbers<[1], [0], [0], [1], [0, 0, 1, 1], [], []>} : vector<128x256xbf16>, vector<256x32xbf16>, vector<128x32xf32> -> vector<128x32xf32>
    %c0_3 = arith.constant 0 : index
    %c0_4 = arith.constant 0 : index
    %3 = vector.load %arg4[%c0_3, %c0_4] : memref<1x32xf32, #tpu.memory_space<vmem>>, vector<1x32xf32>
    %4 = vector.broadcast %3 : vector<1x32xf32> to vector<128x32xf32>
    %5 = arith.addf %2, %4 : vector<128x32xf32>
    %cst_5 = arith.constant 0.000000e+00 : f32
    %6 = vector.broadcast %cst_5 : f32 to vector<128x32xf32>
    %7 = arith.cmpf ogt, %5, %6 : vector<128x32xf32>
    %cst_6 = arith.constant 2.000000e-01 : f32
    %8 = vector.broadcast %cst_6 : f32 to vector<128x32xf32>
    %9 = arith.mulf %8, %5 : vector<128x32xf32>
    %10 = arith.select %7, %5, %9 : vector<128x32xi1>, vector<128x32xf32>
    %11 = arith.truncf %10 : vector<128x32xf32> to vector<128x32xbf16>
    %c0_7 = arith.constant 0 : index
    %c0_8 = arith.constant 0 : index
    %12 = vector.load %arg5[%c0_7, %c0_8] : memref<128x32xbf16, #tpu.memory_space<vmem>>, vector<128x32xbf16>
    tpu.vector_store %arg5[%c0_7, %c0_8], %11 {strides = array<i32>} : memref<128x32xbf16, #tpu.memory_space<vmem>>, vector<128x32xbf16>,
    return
  }
  func.func @transform_0(%arg0: i32, %arg1: i32) -> (i32, i32) {
    %c0_i32 = arith.constant 0 : i32
    %c0_i32_0 = arith.constant 0 : i32
    return %arg1, %c0_i32 : i32, i32
  }
  func.func @transform_1(%arg0: i32, %arg1: i32) -> (i32, i32) {
    %c0_i32 = arith.constant 0 : i32
    %c0_i32_0 = arith.constant 0 : i32
    return %c0_i32, %arg0 : i32, i32
  }
  func.func @transform_2(%arg0: i32, %arg1: i32) -> (i32, i32) {
    %c0_i32 = arith.constant 0 : i32
    %c0_i32_0 = arith.constant 0 : i32
    return %c0_i32, %arg0 : i32, i32
  }
  func.func @transform_3(%arg0: i32, %arg1: i32) -> (i32, i32) {
    %c0_i32 = arith.constant 0 : i32
    return %arg1, %arg0 : i32, i32
  }
}

module attributes {stable_mosaic.version = 11 : i64} {
  func.func @_fused_conv_kernel(%arg0: i32, %arg1: i32, %arg2: memref<32x512xbf16, #tpu.memory_space<vmem>>, %arg3: memref<512x64xbf16, #tpu.memory_space<vmem>>, %arg4: memref<1x64xf32, #tpu.memory_space<vmem>>, %arg5: memref<32x64xbf16, #tpu.memory_space<vmem>>) attributes {dimension_semantics = [#tpu.dimension_semantics<parallel>, #tpu.dimension_semantics<parallel>], iteration_bounds = array<i64: 1, 1>, scalar_prefetch = 0 : i64, scratch_operands = 0 : i64, tpu.core_type = #tpu.core_type<tc>, window_params = [{transform_indices = @transform_0, window_bounds = array<i64: 32, 512>}, {transform_indices = @transform_1, window_bounds = array<i64: 512, 64>}, {transform_indices = @transform_2, window_bounds = array<i64: 1, 64>}, {transform_indices = @transform_3, window_bounds = array<i64: 32, 64>}]} {
    %c0 = arith.constant 0 : index
    %c0_0 = arith.constant 0 : index
    %0 = vector.load %arg2[%c0, %c0_0] : memref<32x512xbf16, #tpu.memory_space<vmem>>, vector<32x512xbf16>
    %c0_1 = arith.constant 0 : index
    %c0_2 = arith.constant 0 : index
    %1 = vector.load %arg3[%c0_1, %c0_2] : memref<512x64xbf16, #tpu.memory_space<vmem>>, vector<512x64xbf16>
    %cst = arith.constant dense<0.000000e+00> : vector<32x64xf32>
    %2 = tpu.matmul %0, %1, %cst {dimension_numbers = #tpu.dot_dimension_numbers<[1], [0], [0], [1], [0, 0, 1, 1], [], []>} : vector<32x512xbf16>, vector<512x64xbf16>, vector<32x64xf32> -> vector<32x64xf32>
    %c0_3 = arith.constant 0 : index
    %c0_4 = arith.constant 0 : index
    %3 = vector.load %arg4[%c0_3, %c0_4] : memref<1x64xf32, #tpu.memory_space<vmem>>, vector<1x64xf32>
    %4 = vector.broadcast %3 : vector<1x64xf32> to vector<32x64xf32>
    %5 = arith.addf %2, %4 : vector<32x64xf32>
    %cst_5 = arith.constant 0.000000e+00 : f32
    %6 = vector.broadcast %cst_5 : f32 to vector<32x64xf32>
    %7 = arith.cmpf ogt, %5, %6 : vector<32x64xf32>
    %cst_6 = arith.constant 2.000000e-01 : f32
    %8 = vector.broadcast %cst_6 : f32 to vector<32x64xf32>
    %9 = arith.mulf %8, %5 : vector<32x64xf32>
    %10 = arith.select %7, %5, %9 : vector<32x64xi1>, vector<32x64xf32>
    %11 = arith.truncf %10 : vector<32x64xf32> to vector<32x64xbf16>
    %c0_7 = arith.constant 0 : index
    %c0_8 = arith.constant 0 : index
    %12 = vector.load %arg5[%c0_7, %c0_8] : memref<32x64xbf16, #tpu.memory_space<vmem>>, vector<32x64xbf16>
    tpu.vector_store %arg5[%c0_7, %c0_8], %11 {strides = array<i32>} : memref<32x64xbf16, #tpu.memory_space<vmem>>, vector<32x64xbf16>,
    return
  }
  func.func @transform_0(%arg0: i32, %arg1: i32) -> (i32, i32) {
    %c0_i32 = arith.constant 0 : i32
    %c0_i32_0 = arith.constant 0 : i32
    return %arg1, %c0_i32 : i32, i32
  }
  func.func @transform_1(%arg0: i32, %arg1: i32) -> (i32, i32) {
    %c0_i32 = arith.constant 0 : i32
    %c0_i32_0 = arith.constant 0 : i32
    return %c0_i32, %arg0 : i32, i32
  }
  func.func @transform_2(%arg0: i32, %arg1: i32) -> (i32, i32) {
    %c0_i32 = arith.constant 0 : i32
    %c0_i32_0 = arith.constant 0 : i32
    return %c0_i32, %arg0 : i32, i32
  }
  func.func @transform_3(%arg0: i32, %arg1: i32) -> (i32, i32) {
    %c0_i32 = arith.constant 0 : i32
    return %arg1, %arg0 : i32, i32
  }
}

module attributes {stable_mosaic.version = 11 : i64} {
  func.func @_fused_conv_kernel(%arg0: i32, %arg1: i32, %arg2: memref<8x1024xbf16, #tpu.memory_space<vmem>>, %arg3: memref<1024x128xbf16, #tpu.memory_space<vmem>>, %arg4: memref<1x128xf32, #tpu.memory_space<vmem>>, %arg5: memref<8x128xbf16, #tpu.memory_space<vmem>>) attributes {dimension_semantics = [#tpu.dimension_semantics<parallel>, #tpu.dimension_semantics<parallel>], iteration_bounds = array<i64: 1, 1>, scalar_prefetch = 0 : i64, scratch_operands = 0 : i64, tpu.core_type = #tpu.core_type<tc>, window_params = [{transform_indices = @transform_0, window_bounds = array<i64: 8, 1024>}, {transform_indices = @transform_1, window_bounds = array<i64: 1024, 128>}, {transform_indices = @transform_2, window_bounds = array<i64: 1, 128>}, {transform_indices = @transform_3, window_bounds = array<i64: 8, 128>}]} {
    %c0 = arith.constant 0 : index
    %c0_0 = arith.constant 0 : index
    %0 = vector.load %arg2[%c0, %c0_0] : memref<8x1024xbf16, #tpu.memory_space<vmem>>, vector<8x1024xbf16>
    %c0_1 = arith.constant 0 : index
    %c0_2 = arith.constant 0 : index
    %1 = vector.load %arg3[%c0_1, %c0_2] : memref<1024x128xbf16, #tpu.memory_space<vmem>>, vector<1024x128xbf16>
    %cst = arith.constant dense<0.000000e+00> : vector<8x128xf32>
    %2 = tpu.matmul %0, %1, %cst {dimension_numbers = #tpu.dot_dimension_numbers<[1], [0], [0], [1], [0, 0, 1, 1], [], []>} : vector<8x1024xbf16>, vector<1024x128xbf16>, vector<8x128xf32> -> vector<8x128xf32>
    %c0_3 = arith.constant 0 : index
    %c0_4 = arith.constant 0 : index
    %3 = vector.load %arg4[%c0_3, %c0_4] : memref<1x128xf32, #tpu.memory_space<vmem>>, vector<1x128xf32>
    %4 = vector.broadcast %3 : vector<1x128xf32> to vector<8x128xf32>
    %5 = arith.addf %2, %4 : vector<8x128xf32>
    %cst_5 = arith.constant 0.000000e+00 : f32
    %6 = vector.broadcast %cst_5 : f32 to vector<8x128xf32>
    %7 = arith.cmpf ogt, %5, %6 : vector<8x128xf32>
    %cst_6 = arith.constant 2.000000e-01 : f32
    %8 = vector.broadcast %cst_6 : f32 to vector<8x128xf32>
    %9 = arith.mulf %8, %5 : vector<8x128xf32>
    %10 = arith.select %7, %5, %9 : vector<8x128xi1>, vector<8x128xf32>
    %11 = arith.truncf %10 : vector<8x128xf32> to vector<8x128xbf16>
    %c0_7 = arith.constant 0 : index
    %c0_8 = arith.constant 0 : index
    %12 = vector.load %arg5[%c0_7, %c0_8] : memref<8x128xbf16, #tpu.memory_space<vmem>>, vector<8x128xbf16>
    tpu.vector_store %arg5[%c0_7, %c0_8], %11 {strides = array<i32>} : memref<8x128xbf16, #tpu.memory_space<vmem>>, vector<8x128xbf16>,
    return
  }
  func.func @transform_0(%arg0: i32, %arg1: i32) -> (i32, i32) {
    %c0_i32 = arith.constant 0 : i32
    %c0_i32_0 = arith.constant 0 : i32
    return %arg1, %c0_i32 : i32, i32
  }
  func.func @transform_1(%arg0: i32, %arg1: i32) -> (i32, i32) {
    %c0_i32 = arith.constant 0 : i32
    %c0_i32_0 = arith.constant 0 : i32
    return %c0_i32, %arg0 : i32, i32
  }
  func.func @transform_2(%arg0: i32, %arg1: i32) -> (i32, i32) {
    %c0_i32 = arith.constant 0 : i32
    %c0_i32_0 = arith.constant 0 : i32
    return %c0_i32, %arg0 : i32, i32
  }
  func.func @transform_3(%arg0: i32, %arg1: i32) -> (i32, i32) {
    %c0_i32 = arith.constant 0 : i32
    return %arg1, %arg0 : i32, i32
  }
}

module attributes {stable_mosaic.version = 11 : i64} {
  func.func @_fused_conv_kernel(%arg0: i32, %arg1: i32, %arg2: memref<8x1152xbf16, #tpu.memory_space<vmem>>, %arg3: memref<1152x128xbf16, #tpu.memory_space<vmem>>, %arg4: memref<1x128xf32, #tpu.memory_space<vmem>>, %arg5: memref<8x128xf32, #tpu.memory_space<vmem>>) attributes {dimension_semantics = [#tpu.dimension_semantics<parallel>, #tpu.dimension_semantics<parallel>], iteration_bounds = array<i64: 1, 1>, scalar_prefetch = 0 : i64, scratch_operands = 0 : i64, tpu.core_type = #tpu.core_type<tc>, window_params = [{transform_indices = @transform_0, window_bounds = array<i64: 8, 1152>}, {transform_indices = @transform_1, window_bounds = array<i64: 1152, 128>}, {transform_indices = @transform_2, window_bounds = array<i64: 1, 128>}, {transform_indices = @transform_3, window_bounds = array<i64: 8, 128>}]} {
    %c0 = arith.constant 0 : index
    %c0_0 = arith.constant 0 : index
    %0 = vector.load %arg2[%c0, %c0_0] : memref<8x1152xbf16, #tpu.memory_space<vmem>>, vector<8x1152xbf16>
    %c0_1 = arith.constant 0 : index
    %c0_2 = arith.constant 0 : index
    %1 = vector.load %arg3[%c0_1, %c0_2] : memref<1152x128xbf16, #tpu.memory_space<vmem>>, vector<1152x128xbf16>
    %cst = arith.constant dense<0.000000e+00> : vector<8x128xf32>
    %2 = tpu.matmul %0, %1, %cst {dimension_numbers = #tpu.dot_dimension_numbers<[1], [0], [0], [1], [0, 0, 1, 1], [], []>} : vector<8x1152xbf16>, vector<1152x128xbf16>, vector<8x128xf32> -> vector<8x128xf32>
    %c0_3 = arith.constant 0 : index
    %c0_4 = arith.constant 0 : index
    %3 = vector.load %arg4[%c0_3, %c0_4] : memref<1x128xf32, #tpu.memory_space<vmem>>, vector<1x128xf32>
    %4 = vector.broadcast %3 : vector<1x128xf32> to vector<8x128xf32>
    %5 = arith.addf %2, %4 : vector<8x128xf32>
    %c0_5 = arith.constant 0 : index
    %c0_6 = arith.constant 0 : index
    %6 = vector.load %arg5[%c0_5, %c0_6] : memref<8x128xf32, #tpu.memory_space<vmem>>, vector<8x128xf32>
    tpu.vector_store %arg5[%c0_5, %c0_6], %5 {strides = array<i32>} : memref<8x128xf32, #tpu.memory_space<vmem>>, vector<8x128xf32>,
    return
  }
  func.func @transform_0(%arg0: i32, %arg1: i32) -> (i32, i32) {
    %c0_i32 = arith.constant 0 : i32
    %c0_i32_0 = arith.constant 0 : i32
    return %arg1, %c0_i32 : i32, i32
  }
  func.func @transform_1(%arg0: i32, %arg1: i32) -> (i32, i32) {
    %c0_i32 = arith.constant 0 : i32
    %c0_i32_0 = arith.constant 0 : i32
    return %c0_i32, %arg0 : i32, i32
  }
  func.func @transform_2(%arg0: i32, %arg1: i32) -> (i32, i32) {
    %c0_i32 = arith.constant 0 : i32
    %c0_i32_0 = arith.constant 0 : i32
    return %c0_i32, %arg0 : i32, i32
  }
  func.func @transform_3(%arg0: i32, %arg1: i32) -> (i32, i32) {
    %c0_i32 = arith.constant 0 : i32
    return %arg1, %arg0 : i32, i32
  }
}

</mosaic_0001>

<llo_original>
// kernel: tpu_custom_call.1
$region0: #{tpu_custom_call.1}
  #allocation0 [shape = 'u32[]', space=smem, size = 0x4, offset = 0x4, fixed_abs, tag = 'smem constant byte address 0x4 - core index']
  #allocation1 [shape = 'u32[72,128]{1,0:T(1,128)}', space=vmem, size = 0x9000, scoped, tag = 'internal scratch']
  %s0 = inlined_call_operand.hbm [shape: f32[8,128], index: 0, kind: input, shape index: {}]
  %s1 = inlined_call_operand.hbm [shape: f32[16,128], index: 1, kind: output, shape index: {}]
  %s2 = sld [smem:[#allocation0]]
  $region41: #{tpu_custom_call.1} parent=0
    _
  %s4 = ssub.s32 1, %s2
  %s5 = scalar_select 0, %s4, %s2
  $region1: #{tpu_custom_call.1} parent=0
    #allocation2 [shape = 'u8[4096]{0}', space=vmem, size = 0x1000, scoped, tag = 'input window, operand 0, single buffered']
    #allocation3 [shape = 's32[2]{0}', space=sflag, size = 0x8, scoped, tag = 'scoped memory for tpu_custom_call.1']
    #allocation4 [shape = 's32[2]{0}', space=sflag, size = 0x8, scoped, tag = 'scoped memory for tpu_custom_call.1']
    #allocation5 [shape = 'u8[8192]{0}', space=vmem, size = 0x2000, scoped, tag = 'output window, operand 0']
    %6 = vsyncpa [#allocation3], 0
    %7 = vsyncpa [#allocation4], 0
    %s8 = scalar_lea.sflag [#allocation4], 1
    %9 = vsyncpa %s8, 0
    loop: start=0, step=1, limit=4
    $region2: #{tpu_custom_call.1} parent=1 // loop_pre_header
      _
    $region3: #{tpu_custom_call.1} parent=1 // loop_header
      %s11 = sphi 0, %s15
      %p12 = scmp.ge.s32.totalorder %s11, 4
      %s19 = sphi 0, %s19
      %s21 = sphi 0, %s19
      %s22 = sphi 0, %s21
      %s36 = sphi 0, %s22
      %s42 = sphi 0, %s44
      %s45 = sphi 0, %s42
      %s46 = sphi 0, %s45
      %s62 = sphi 0, %s46
    $region4: #{tpu_custom_call.1} parent=1 // loop_header_branch
      %14 = sbr.rel (%p12) target = $region8
    $region5: #{tpu_custom_call.1} parent=1 // loop_body
      %s16 = ssub.s32 %s11, 1
      %s17 = ssub.s32 %s11, 2
      %s18 = sadd.s32 %s11, 1
      %s20 = sadd.s32 %s19, 1
      %p23 = scmp.eq.s32.totalorder %s11, 1
      %p24 = scmp.ne.s32.totalorder %s19, %s21
      %p25 = scmp.eq.s32.totalorder %s11, 0
      %p26 = por %p24, %p25
      %p27 = scmp.ne.s32.totalorder %s19, %s21
      %p28 = scmp.eq.s32.totalorder %s16, 1
      %p29 = por %p27, %p28
      %p30 = scmp.ne.s32.totalorder %s21, %s22
      %p31 = scmp.eq.s32.totalorder %s16, 0
      %p32 = por %p30, %p31
      %p33 = scmp.ne.s32.totalorder %s21, %s22
      %p34 = scmp.eq.s32.totalorder %s17, 1
      %p35 = por %p33, %p34
      %p37 = scmp.ne.s32.totalorder %s22, %s36
      %p38 = scmp.eq.s32.totalorder %s17, 0
      %p39 = por %p37, %p38
      %s40 = ssub.s32 %s11, %s18
      %p41 = scmp.eq.s32.totalorder %s40, 0
      %s43 = sadd.s32 %s42, 1
      %s44 = scalar_select %p41, %s42, %s43
      %p47 = pneg %p41
      %p48 = scmp.eq.s32.totalorder %s11, 1
      %p49 = por %p47, %p48
      %p50 = scmp.ne.s32.totalorder %s42, %s45
      %p51 = scmp.eq.s32.totalorder %s11, 0
      %p52 = por %p50, %p51
      %p53 = scmp.ne.s32.totalorder %s42, %s45
      %p54 = scmp.eq.s32.totalorder %s16, 1
      %p55 = por %p53, %p54
      %p56 = scmp.ne.s32.totalorder %s45, %s46
      %p57 = scmp.eq.s32.totalorder %s16, 0
      %p58 = por %p56, %p57
      %p59 = scmp.ne.s32.totalorder %s45, %s46
      %p60 = scmp.eq.s32.totalorder %s17, 1
      %p61 = por %p59, %p60
      %p63 = scmp.ne.s32.totalorder %s46, %s62
      %p64 = scmp.eq.s32.totalorder %s17, 0
      %p65 = por %p63, %p64
      %p66 = scmp.le.s32.totalorder 1, %s11
      %p67 = scmp.lt.s32.totalorder %s11, 3
      %p68 = pnand %p66, %p67
      %p69 = pneg %p68
      // Predicated region
      $region9: #{tpu_custom_call.1} parent=5 // pred_check
        _
      $region10: #{tpu_custom_call.1} parent=5 // pred_check_branch
        %71 = sbr.rel (%p68) target = $region12
      $region11: #{tpu_custom_call.1} parent=5 // pred_region
        %s72 = ssub.s32 %s11, 1
        // Predicated region
        $region13: #{tpu_custom_call.1} parent=11 // pred_check
          %p73 = pneg %p32
        $region14: #{tpu_custom_call.1} parent=11 // pred_check_branch
          %75 = sbr.rel (%p73) target = $region16
        $region15: #{tpu_custom_call.1} parent=11 // pred_region
          %77 = vsyncadd [#allocation3], 0
          %s79 = sshll.u32 %s0, 4
          %s80 = int_to_ptr.hbm [resolvable:$true] %s79
          %s81 = sshll.u32 [#allocation2], 4
          %s82 = int_to_ptr.vmem [resolvable:$true] %s81
          %84 = dma.hbm_to_vmem [thread:$0]  %s80, 128, %s82, [#allocation3]
        $region16: #{tpu_custom_call.1} parent=11 // pred_fallthru
          _
      $region12: #{tpu_custom_call.1} parent=5 // pred_fallthru
        _
      %p85 = scmp.lt.s32.totalorder %s11, 2
      // Predicated region
      $region17: #{tpu_custom_call.1} parent=5 // pred_check
        %p86 = pneg %p85
      $region18: #{tpu_custom_call.1} parent=5 // pred_check_branch
        %88 = sbr.rel (%p86) target = $region20
      $region19: #{tpu_custom_call.1} parent=5 // pred_region
        _
      $region20: #{tpu_custom_call.1} parent=5 // pred_fallthru
        _
      %p89 = scmp.le.s32.totalorder 1, %s11
      %p90 = scmp.lt.s32.totalorder %s11, 3
      %p91 = pnand %p89, %p90
      %p92 = pneg %p91
      // Predicated region
      $region21: #{tpu_custom_call.1} parent=5 // pred_check
        _
      $region22: #{tpu_custom_call.1} parent=5 // pred_check_branch
        %94 = sbr.rel (%p91) target = $region24
      $region23: #{tpu_custom_call.1} parent=5 // pred_region
        %s95 = ssub.s32 %s11, 1
        // Predicated region
        $region25: #{tpu_custom_call.1} parent=23 // pred_check
          %p96 = pneg %p32
        $region26: #{tpu_custom_call.1} parent=23 // pred_check_branch
          %98 = sbr.rel (%p96) target = $region28
        $region27: #{tpu_custom_call.1} parent=23 // pred_region
          %100 = dma.done [#allocation3], 128
        $region28: #{tpu_custom_call.1} parent=23 // pred_fallthru
          _
        %p101 = pneg %p32
        %p102 = pneg %p29
        %p103 = pneg %p58
        %p104 = pneg %p55
        %s105 = sand.u32 %s45, 1
        %s106 = scalar_lea.sflag [#allocation4], %s105
        %s107 = sand.u32 %s45, 1
        %s108 = smul.addr %s107, 8
        %s109 = scalar_lea.vmem [#allocation5], %s108
        %v110 = vld [vmem:[#allocation2] sm:$0xff]
        %v111 = vadd.f32 %v110, 1.0
        %112 = vst [vmem:[%s109] sm:$0xff] %v111
        %s113 = sand.u32 %s45, 1
        %s114 = scalar_lea.sflag [#allocation4], %s113
        %s115 = sand.u32 %s45, 1
        %s116 = smul.addr %s115, 8
        %s117 = scalar_lea.vmem [#allocation5], %s116
        // Predicated region
        $region29: #{tpu_custom_call.1} parent=23 // pred_check
          %p118 = pneg %p55
        $region30: #{tpu_custom_call.1} parent=23 // pred_check_branch
          %120 = sbr.rel (%p118) target = $region32
        $region31: #{tpu_custom_call.1} parent=23 // pred_region
          %122 = vsyncadd %s114, 0
          %s123 = smul.addr %s16, 8
          %s124 = scalar_lea.hbm %s1, %s123
          %s126 = sshll.u32 %s117, 4
          %s127 = int_to_ptr.vmem [resolvable:$true] %s126
          %s128 = sshll.u32 %s124, 4
          %s129 = int_to_ptr.hbm [resolvable:$true] %s128
          %131 = dma.vmem_to_hbm [thread:$0]  %s127, 128, %s129, %s114
        $region32: #{tpu_custom_call.1} parent=23 // pred_fallthru
          _
      $region24: #{tpu_custom_call.1} parent=5 // pred_fallthru
        _
      %p132 = scmp.le.s32.totalorder 2, %s11
      // Predicated region
      $region33: #{tpu_custom_call.1} parent=5 // pred_check
        %p133 = pneg %p132
      $region34: #{tpu_custom_call.1} parent=5 // pred_check_branch
        %135 = sbr.rel (%p133) target = $region36
      $region35: #{tpu_custom_call.1} parent=5 // pred_region
        %s136 = ssub.s32 %s11, 2
        // Predicated region
        $region37: #{tpu_custom_call.1} parent=35 // pred_check
          %p137 = pneg %p61
        $region38: #{tpu_custom_call.1} parent=35 // pred_check_branch
          %139 = sbr.rel (%p137) target = $region40
        $region39: #{tpu_custom_call.1} parent=35 // pred_region
          %s140 = sand.u32 %s46, 1
          %s141 = scalar_lea.sflag [#allocation4], %s140
          %s142 = sand.u32 %s46, 1
          %s143 = smul.addr %s142, 8
          %s144 = scalar_lea.vmem [#allocation5], %s143
          %146 = dma.done %s141, 128
        $region40: #{tpu_custom_call.1} parent=35 // pred_fallthru
          _
      $region36: #{tpu_custom_call.1} parent=5 // pred_fallthru
        _
    $region6: #{tpu_custom_call.1} parent=1 // loop_footer
      %s15 = sadd.s32 1, %s11
    $region7: #{tpu_custom_call.1} parent=1 // loop_footer_branch
      %10 = sbr.rel target = $region3
    $region8: #{tpu_custom_call.1} parent=1 // loop_exit
      _
    %147 = vsyncpa [#allocation3], 1
    %s148 = scalar_lea.sflag [#allocation3], 1
    %149 = vsyncpa %s148, 1
    %150 = vsyncpa [#allocation4], 1
    %s151 = scalar_lea.sflag [#allocation4], 1
    %152 = vsyncpa %s151, 1

// kernel: discriminator_forward.5
$region0: #{discriminator_forward.5}
  #allocation0 [shape = 'u32[]', space=smem, size = 0x4, offset = 0x4, fixed_abs, tag = 'smem constant byte address 0x4 - core index']
  #allocation1 [shape = 'u32[72,128]{1,0:T(1,128)}', space=vmem, size = 0x9000, scoped, tag = 'internal scratch']
  %s0 = inlined_call_operand.vmem [shape: bf16[512,48], index: 0, kind: input, shape index: {}]
  %s1 = inlined_call_operand.vmem [shape: bf16[48,16], index: 1, kind: input, shape index: {}]
  %s2 = inlined_call_operand.vmem [shape: f32[1,16], index: 2, kind: input, shape index: {}]
  %s3 = inlined_call_operand.vmem [shape: bf16[512,16], index: 3, kind: output, shape index: {}]
  %s4 = sld [smem:[#allocation0]]
  $region22: #{discriminator_forward.5} parent=0
    _
  %s6 = ssub.s32 1, %s4
  %s7 = scalar_select 0, %s6, %s4
  // Predicated region
  $region2: #{discriminator_forward.5} parent=0 // pred_check
    _
  $region3: #{discriminator_forward.5} parent=0 // pred_check_branch
    %9 = sbr.rel (0) target = $region5
  $region4: #{discriminator_forward.5} parent=0 // pred_region
    _
  $region5: #{discriminator_forward.5} parent=0 // pred_fallthru
    _
  // Predicated region
  $region6: #{discriminator_forward.5} parent=0 // pred_check
    _
  $region7: #{discriminator_forward.5} parent=0 // pred_check_branch
    %11 = sbr.rel (0) target = $region9
  $region8: #{discriminator_forward.5} parent=0 // pred_region
    _
  $region9: #{discriminator_forward.5} parent=0 // pred_fallthru
    _
  // Predicated region
  $region10: #{discriminator_forward.5} parent=0 // pred_check
    _
  $region11: #{discriminator_forward.5} parent=0 // pred_check_branch
    %13 = sbr.rel (0) target = $region13
  $region12: #{discriminator_forward.5} parent=0 // pred_region
    _
  $region13: #{discriminator_forward.5} parent=0 // pred_fallthru
    _
  %v15 = vld [vmem:[%s0] sm:$0xf]
  %v16 = vld [vmem:[%s0 + $0x4] sm:$0xf]
  %v17 = vld [vmem:[%s0 + $0x8] sm:$0xf]
  %v18 = vld [vmem:[%s0 + $0xc] sm:$0xf]
  %v19 = vld [vmem:[%s0 + $0x10] sm:$0xf]
  %v20 = vld [vmem:[%s0 + $0x14] sm:$0xf]
  %v21 = vld [vmem:[%s0 + $0x18] sm:$0xf]
  %v22 = vld [vmem:[%s0 + $0x1c] sm:$0xf]
  %v23 = vld [vmem:[%s0 + $0x20] sm:$0xf]
  %v24 = vld [vmem:[%s0 + $0x24] sm:$0xf]
  %v25 = vld [vmem:[%s0 + $0x28] sm:$0xf]
  %v26 = vld [vmem:[%s0 + $0x2c] sm:$0xf]
  %v27 = vld [vmem:[%s0 + $0x30] sm:$0xf]
  %v28 = vld [vmem:[%s0 + $0x34] sm:$0xf]
  %v29 = vld [vmem:[%s0 + $0x38] sm:$0xf]
  %v30 = vld [vmem:[%s0 + $0x3c] sm:$0xf]
  %v31 = vld [vmem:[%s0 + $0x40] sm:$0xf]
  %v32 = vld [vmem:[%s0 + $0x44] sm:$0xf]
  %v33 = vld [vmem:[%s0 + $0x48] sm:$0xf]
  %v34 = vld [vmem:[%s0 + $0x4c] sm:$0xf]
  %v35 = vld [vmem:[%s0 + $0x50] sm:$0xf]
  %v36 = vld [vmem:[%s0 + $0x54] sm:$0xf]
  %v37 = vld [vmem:[%s0 + $0x58] sm:$0xf]
  %v38 = vld [vmem:[%s0 + $0x5c] sm:$0xf]
  %v39 = vld [vmem:[%s0 + $0x60] sm:$0xf]
  %v40 = vld [vmem:[%s0 + $0x64] sm:$0xf]
  %v41 = vld [vmem:[%s0 + $0x68] sm:$0xf]
  %v42 = vld [vmem:[%s0 + $0x6c] sm:$0xf]
  %v43 = vld [vmem:[%s0 + $0x70] sm:$0xf]
  %v44 = vld [vmem:[%s0 + $0x74] sm:$0xf]
  %v45 = vld [vmem:[%s0 + $0x78] sm:$0xf]
  %v46 = vld [vmem:[%s0 + $0x7c] sm:$0xf]
  %v47 = vld [vmem:[%s0 + $0x80] sm:$0xf]
  %v48 = vld [vmem:[%s0 + $0x84] sm:$0xf]
  %v49 = vld [vmem:[%s0 + $0x88] sm:$0xf]
  %v50 = vld [vmem:[%s0 + $0x8c] sm:$0xf]
  %v51 = vld [vmem:[%s0 + $0x90] sm:$0xf]
  %v52 = vld [vmem:[%s0 + $0x94] sm:$0xf]
  %v53 = vld [vmem:[%s0 + $0x98] sm:$0xf]
  %v54 = vld [vmem:[%s0 + $0x9c] sm:$0xf]
  %v55 = vld [vmem:[%s0 + $0xa0] sm:$0xf]
  %v56 = vld [vmem:[%s0 + $0xa4] sm:$0xf]
  %v57 = vld [vmem:[%s0 + $0xa8] sm:$0xf]
  %v58 = vld [vmem:[%s0 + $0xac] sm:$0xf]
  %v59 = vld [vmem:[%s0 + $0xb0] sm:$0xf]
  %v60 = vld [vmem:[%s0 + $0xb4] sm:$0xf]
  %v61 = vld [vmem:[%s0 + $0xb8] sm:$0xf]
  %v62 = vld [vmem:[%s0 + $0xbc] sm:$0xf]
  %v63 = vld [vmem:[%s0 + $0xc0] sm:$0xf]
  %v64 = vld [vmem:[%s0 + $0xc4] sm:$0xf]
  %v65 = vld [vmem:[%s0 + $0xc8] sm:$0xf]
  %v66 = vld [vmem:[%s0 + $0xcc] sm:$0xf]
  %v67 = vld [vmem:[%s0 + $0xd0] sm:$0xf]
  %v68 = vld [vmem:[%s0 + $0xd4] sm:$0xf]
  %v69 = vld [vmem:[%s0 + $0xd8] sm:$0xf]
  %v70 = vld [vmem:[%s0 + $0xdc] sm:$0xf]
  %v71 = vld [vmem:[%s0 + $0xe0] sm:$0xf]
  %v72 = vld [vmem:[%s0 + $0xe4] sm:$0xf]
  %v73 = vld [vmem:[%s0 + $0xe8] sm:$0xf]
  %v74 = vld [vmem:[%s0 + $0xec] sm:$0xf]
  %v75 = vld [vmem:[%s0 + $0xf0] sm:$0xf]
  %v76 = vld [vmem:[%s0 + $0xf4] sm:$0xf]
  %v77 = vld [vmem:[%s0 + $0xf8] sm:$0xf]
  %v78 = vld [vmem:[%s0 + $0xfc] sm:$0xf]
  %v79 = vld [vmem:[%s1] sm:$0xf]
  %v80 = vld [vmem:[%s1 + $0x4] sm:$0xf]
  %v81 = vld [vmem:[%s1 + $0x8] sm:$0xf]
  %v82 = vld [vmem:[%s1 + $0xc] sm:$0xf]
  %v83 = vld [vmem:[%s1 + $0x10] sm:$0xf]
  %v84 = vld [vmem:[%s1 + $0x14] sm:$0xf]
  %v85 = vld [vmem:[%s2] sm:$0x1]
  %v87 = vperm.slane %v85, 0
  %v153 = vunpack.c.l.b16 %v15
  %v154 = vunpack.c.l.b16 %v16
  %v155 = vunpack.c.l.b16 %v17
  %v156 = vunpack.c.l.b16 %v18
  %v157 = vunpack.c.l.b16 %v19
  %v158 = vunpack.c.l.b16 %v20
  %v159 = vunpack.c.l.b16 %v21
  %v160 = vunpack.c.l.b16 %v22
  %v161 = vunpack.c.l.b16 %v23
  %v162 = vunpack.c.l.b16 %v24
  %v163 = vunpack.c.l.b16 %v25
  %v164 = vunpack.c.l.b16 %v26
  %v165 = vunpack.c.l.b16 %v27
  %v166 = vunpack.c.l.b16 %v28
  %v167 = vunpack.c.l.b16 %v29
  %v168 = vunpack.c.l.b16 %v30
  %v169 = vunpack.c.l.b16 %v31
  %v170 = vunpack.c.l.b16 %v32
  %v171 = vunpack.c.l.b16 %v33
  %v172 = vunpack.c.l.b16 %v34
  %v173 = vunpack.c.l.b16 %v35
  %v174 = vunpack.c.l.b16 %v36
  %v175 = vunpack.c.l.b16 %v37
  %v176 = vunpack.c.l.b16 %v38
  %v177 = vunpack.c.l.b16 %v39
  %v178 = vunpack.c.l.b16 %v40
  %v179 = vunpack.c.l.b16 %v41
  %v180 = vunpack.c.l.b16 %v42
  %v181 = vunpack.c.l.b16 %v43
  %v182 = vunpack.c.l.b16 %v44
  %v183 = vunpack.c.l.b16 %v45
  %v184 = vunpack.c.l.b16 %v46
  %v185 = vunpack.c.l.b16 %v47
  %v186 = vunpack.c.l.b16 %v48
  %v187 = vunpack.c.l.b16 %v49
  %v188 = vunpack.c.l.b16 %v50
  %v189 = vunpack.c.l.b16 %v51
  %v190 = vunpack.c.l.b16 %v52
  %v191 = vunpack.c.l.b16 %v53
  %v192 = vunpack.c.l.b16 %v54
  %v193 = vunpack.c.l.b16 %v55
  %v194 = vunpack.c.l.b16 %v56
  %v195 = vunpack.c.l.b16 %v57
  %v196 = vunpack.c.l.b16 %v58
  %v197 = vunpack.c.l.b16 %v59
  %v198 = vunpack.c.l.b16 %v60
  %v199 = vunpack.c.l.b16 %v61
  %v200 = vunpack.c.l.b16 %v62
  %v201 = vunpack.c.l.b16 %v63
  %v202 = vunpack.c.l.b16 %v64
  %v203 = vunpack.c.l.b16 %v65
  %v204 = vunpack.c.l.b16 %v66
  %v205 = vunpack.c.l.b16 %v67
  %v206 = vunpack.c.l.b16 %v68
  %v207 = vunpack.c.l.b16 %v69
  %v208 = vunpack.c.l.b16 %v70
  %v209 = vunpack.c.l.b16 %v71
  %v210 = vunpack.c.l.b16 %v72
  %v211 = vunpack.c.l.b16 %v73
  %v212 = vunpack.c.l.b16 %v74
  %v213 = vunpack.c.l.b16 %v75
  %v214 = vunpack.c.l.b16 %v76
  %v215 = vunpack.c.l.b16 %v77
  %v216 = vunpack.c.l.b16 %v78
  %v217 = vpack.c.b16 %v154, %v153
  %v218 = vpack.c.b16 %v156, %v155
  %v219 = vpack.c.b16 %v158, %v157
  %v220 = vpack.c.b16 %v160, %v159
  %v221 = vpack.c.b16 %v162, %v161
  %v222 = vpack.c.b16 %v164, %v163
  %v223 = vpack.c.b16 %v166, %v165
  %v224 = vpack.c.b16 %v168, %v167
  %v225 = vpack.c.b16 %v170, %v169
  %v226 = vpack.c.b16 %v172, %v171
  %v227 = vpack.c.b16 %v174, %v173
  %v228 = vpack.c.b16 %v176, %v175
  %v229 = vpack.c.b16 %v178, %v177
  %v230 = vpack.c.b16 %v180, %v179
  %v231 = vpack.c.b16 %v182, %v181
  %v232 = vpack.c.b16 %v184, %v183
  %v233 = vpack.c.b16 %v186, %v185
  %v234 = vpack.c.b16 %v188, %v187
  %v235 = vpack.c.b16 %v190, %v189
  %v236 = vpack.c.b16 %v192, %v191
  %v237 = vpack.c.b16 %v194, %v193
  %v238 = vpack.c.b16 %v196, %v195
  %v239 = vpack.c.b16 %v198, %v197
  %v240 = vpack.c.b16 %v200, %v199
  %v241 = vpack.c.b16 %v202, %v201
  %v242 = vpack.c.b16 %v204, %v203
  %v243 = vpack.c.b16 %v206, %v205
  %v244 = vpack.c.b16 %v208, %v207
  %v245 = vpack.c.b16 %v210, %v209
  %v246 = vpack.c.b16 %v212, %v211
  %v247 = vpack.c.b16 %v214, %v213
  %v248 = vpack.c.b16 %v216, %v215
  %v255 = vunpack.c.l.b16 %v79
  %v256 = vunpack.c.l.b16 %v80
  %v257 = vunpack.c.l.b16 %v81
  %v258 = vunpack.c.l.b16 %v82
  %v259 = vunpack.c.l.b16 %v83
  %v260 = vunpack.c.l.b16 %v84
  %v261 = vpack.c.b16 %v256, %v255
  %v262 = vpack.c.b16 %v258, %v257
  %v263 = vpack.c.b16 %v260, %v259
  %vm267 = vcmask 392192
  %v269 = vsel %vm267, %v217, 0
  %v272 = vsel %vm267, %v218, 0
  %v275 = vsel %vm267, %v219, 0
  %v278 = vsel %vm267, %v220, 0
  %v281 = vsel %vm267, %v221, 0
  %v284 = vsel %vm267, %v222, 0
  %v287 = vsel %vm267, %v223, 0
  %v290 = vsel %vm267, %v224, 0
  %v293 = vsel %vm267, %v225, 0
  %v296 = vsel %vm267, %v226, 0
  %v299 = vsel %vm267, %v227, 0
  %v302 = vsel %vm267, %v228, 0
  %v305 = vsel %vm267, %v229, 0
  %v308 = vsel %vm267, %v230, 0
  %v311 = vsel %vm267, %v231, 0
  %v314 = vsel %vm267, %v232, 0
  %v317 = vsel %vm267, %v233, 0
  %v320 = vsel %vm267, %v234, 0
  %v323 = vsel %vm267, %v235, 0
  %v326 = vsel %vm267, %v236, 0
  %v329 = vsel %vm267, %v237, 0
  %v332 = vsel %vm267, %v238, 0
  %v335 = vsel %vm267, %v239, 0
  %v338 = vsel %vm267, %v240, 0
  %v341 = vsel %vm267, %v241, 0
  %v344 = vsel %vm267, %v242, 0
  %v347 = vsel %vm267, %v243, 0
  %v350 = vsel %vm267, %v244, 0
  %v353 = vsel %vm267, %v245, 0
  %v356 = vsel %vm267, %v246, 0
  %v359 = vsel %vm267, %v247, 0
  %v362 = vsel %vm267, %v248, 0
  %364 = vmatpush.bf16.msra.mxu0 0
  %365 = vmatpush.bf16.msra.mxu0 0
  %366 = vmatpush.bf16.msra.mxu0 0
  %367 = vmatpush.bf16.msra.mxu0 0
  %368 = vmatpush.bf16.msra.mxu0 0
  %369 = vmatpush.bf16.msra.mxu0 %v263
  %370 = vmatpush.bf16.msra.mxu0 %v262
  %371 = vmatpush.bf16.msra.mxu0 %v261
  %372 = vmatmul.bf16.gmra.mxu0 %v269
  %v373 = vpop.f32.mrf.mxu0
  %v374 = vadd.f32 %v87, %v373
  %v375 = vpop.f32.mrf.mxu0
  %v376 = vadd.f32 %v87, %v375
  %377 = vmatmul.bf16.gmra.mxu0 %v272
  %v378 = vpop.f32.mrf.mxu0
  %v379 = vadd.f32 %v87, %v378
  %v380 = vpop.f32.mrf.mxu0
  %v381 = vadd.f32 %v87, %v380
  %382 = vmatmul.bf16.gmra.mxu0 %v275
  %v383 = vpop.f32.mrf.mxu0
  %v384 = vadd.f32 %v87, %v383
  %v385 = vpop.f32.mrf.mxu0
  %v386 = vadd.f32 %v87, %v385
  %387 = vmatmul.bf16.gmra.mxu0 %v278
  %v388 = vpop.f32.mrf.mxu0
  %v389 = vadd.f32 %v87, %v388
  %v390 = vpop.f32.mrf.mxu0
  %v391 = vadd.f32 %v87, %v390
  %392 = vmatmul.bf16.gmra.mxu0 %v281
  %v393 = vpop.f32.mrf.mxu0
  %v394 = vadd.f32 %v87, %v393
  %v395 = vpop.f32.mrf.mxu0
  %v396 = vadd.f32 %v87, %v395
  %397 = vmatmul.bf16.gmra.mxu0 %v284
  %v398 = vpop.f32.mrf.mxu0
  %v399 = vadd.f32 %v87, %v398
  %v400 = vpop.f32.mrf.mxu0
  %v401 = vadd.f32 %v87, %v400
  %402 = vmatmul.bf16.gmra.mxu0 %v287
  %v403 = vpop.f32.mrf.mxu0
  %v404 = vadd.f32 %v87, %v403
  %v405 = vpop.f32.mrf.mxu0
  %v406 = vadd.f32 %v87, %v405
  %407 = vmatmul.bf16.gmra.mxu0 %v290
  %v408 = vpop.f32.mrf.mxu0
  %v409 = vadd.f32 %v87, %v408
  %v410 = vpop.f32.mrf.mxu0
  %v411 = vadd.f32 %v87, %v410
  %412 = vmatmul.bf16.gmra.mxu0 %v293
  %v413 = vpop.f32.mrf.mxu0
  %v414 = vadd.f32 %v87, %v413
  %v415 = vpop.f32.mrf.mxu0
  %v416 = vadd.f32 %v87, %v415
  %417 = vmatmul.bf16.gmra.mxu0 %v296
  %v418 = vpop.f32.mrf.mxu0
  %v419 = vadd.f32 %v87, %v418
  %v420 = vpop.f32.mrf.mxu0
  %v421 = vadd.f32 %v87, %v420
  %422 = vmatmul.bf16.gmra.mxu0 %v299
  %v423 = vpop.f32.mrf.mxu0
  %v424 = vadd.f32 %v87, %v423
  %v425 = vpop.f32.mrf.mxu0
  %v426 = vadd.f32 %v87, %v425
  %427 = vmatmul.bf16.gmra.mxu0 %v302
  %v428 = vpop.f32.mrf.mxu0
  %v429 = vadd.f32 %v87, %v428
  %v430 = vpop.f32.mrf.mxu0
  %v431 = vadd.f32 %v87, %v430
  %432 = vmatmul.bf16.gmra.mxu0 %v305
  %v433 = vpop.f32.mrf.mxu0
  %v434 = vadd.f32 %v87, %v433
  %v435 = vpop.f32.mrf.mxu0
  %v436 = vadd.f32 %v87, %v435
  %437 = vmatmul.bf16.gmra.mxu0 %v308
  %v438 = vpop.f32.mrf.mxu0
  %v439 = vadd.f32 %v87, %v438
  %v440 = vpop.f32.mrf.mxu0
  %v441 = vadd.f32 %v87, %v440
  %442 = vmatmul.bf16.gmra.mxu0 %v311
  %v443 = vpop.f32.mrf.mxu0
  %v444 = vadd.f32 %v87, %v443
  %v445 = vpop.f32.mrf.mxu0
  %v446 = vadd.f32 %v87, %v445
  %447 = vmatmul.bf16.gmra.mxu0 %v314
  %v448 = vpop.f32.mrf.mxu0
  %v449 = vadd.f32 %v87, %v448
  %v450 = vpop.f32.mrf.mxu0
  %v451 = vadd.f32 %v87, %v450
  %452 = vmatmul.bf16.gmra.mxu0 %v317
  %v453 = vpop.f32.mrf.mxu0
  %v454 = vadd.f32 %v87, %v453
  %v455 = vpop.f32.mrf.mxu0
  %v456 = vadd.f32 %v87, %v455
  %457 = vmatmul.bf16.gmra.mxu0 %v320
  %v458 = vpop.f32.mrf.mxu0
  %v459 = vadd.f32 %v87, %v458
  %v460 = vpop.f32.mrf.mxu0
  %v461 = vadd.f32 %v87, %v460
  %462 = vmatmul.bf16.gmra.mxu0 %v323
  %v463 = vpop.f32.mrf.mxu0
  %v464 = vadd.f32 %v87, %v463
  %v465 = vpop.f32.mrf.mxu0
  %v466 = vadd.f32 %v87, %v465
  %467 = vmatmul.bf16.gmra.mxu0 %v326
  %v468 = vpop.f32.mrf.mxu0
  %v469 = vadd.f32 %v87, %v468
  %v470 = vpop.f32.mrf.mxu0
  %v471 = vadd.f32 %v87, %v470
  %472 = vmatmul.bf16.gmra.mxu0 %v329
  %v473 = vpop.f32.mrf.mxu0
  %v474 = vadd.f32 %v87, %v473
  %v475 = vpop.f32.mrf.mxu0
  %v476 = vadd.f32 %v87, %v475
  %477 = vmatmul.bf16.gmra.mxu0 %v332
  %v478 = vpop.f32.mrf.mxu0
  %v479 = vadd.f32 %v87, %v478
  %v480 = vpop.f32.mrf.mxu0
  %v481 = vadd.f32 %v87, %v480
  %482 = vmatmul.bf16.gmra.mxu0 %v335
  %v483 = vpop.f32.mrf.mxu0
  %v484 = vadd.f32 %v87, %v483
  %v485 = vpop.f32.mrf.mxu0
  %v486 = vadd.f32 %v87, %v485
  %487 = vmatmul.bf16.gmra.mxu0 %v338
  %v488 = vpop.f32.mrf.mxu0
  %v489 = vadd.f32 %v87, %v488
  %v490 = vpop.f32.mrf.mxu0
  %v491 = vadd.f32 %v87, %v490
  %492 = vmatmul.bf16.gmra.mxu0 %v341
  %v493 = vpop.f32.mrf.mxu0
  %v494 = vadd.f32 %v87, %v493
  %v495 = vpop.f32.mrf.mxu0
  %v496 = vadd.f32 %v87, %v495
  %497 = vmatmul.bf16.gmra.mxu0 %v344
  %v498 = vpop.f32.mrf.mxu0
  %v499 = vadd.f32 %v87, %v498
  %v500 = vpop.f32.mrf.mxu0
  %v501 = vadd.f32 %v87, %v500
  %502 = vmatmul.bf16.gmra.mxu0 %v347
  %v503 = vpop.f32.mrf.mxu0
  %v504 = vadd.f32 %v87, %v503
  %v505 = vpop.f32.mrf.mxu0
  %v506 = vadd.f32 %v87, %v505
  %507 = vmatmul.bf16.gmra.mxu0 %v350
  %v508 = vpop.f32.mrf.mxu0
  %v509 = vadd.f32 %v87, %v508
  %v510 = vpop.f32.mrf.mxu0
  %v511 = vadd.f32 %v87, %v510
  %512 = vmatmul.bf16.gmra.mxu0 %v353
  %v513 = vpop.f32.mrf.mxu0
  %v514 = vadd.f32 %v87, %v513
  %v515 = vpop.f32.mrf.mxu0
  %v516 = vadd.f32 %v87, %v515
  %517 = vmatmul.bf16.gmra.mxu0 %v356
  %v518 = vpop.f32.mrf.mxu0
  %v519 = vadd.f32 %v87, %v518
  %v520 = vpop.f32.mrf.mxu0
  %v521 = vadd.f32 %v87, %v520
  %522 = vmatmul.bf16.gmra.mxu0 %v359
  %v523 = vpop.f32.mrf.mxu0
  %v524 = vadd.f32 %v87, %v523
  %v525 = vpop.f32.mrf.mxu0
  %v526 = vadd.f32 %v87, %v525
  %527 = vmatmul.bf16.gmra.mxu0 %v362
  %v528 = vpop.f32.mrf.mxu0
  %v529 = vadd.f32 %v87, %v528
  %v530 = vpop.f32.mrf.mxu0
  %v531 = vadd.f32 %v87, %v530
  %532 = vdwg.mxu0
  %vm533 = vcmp.gt.f32.partialorder %v374, 0.0
  %vm534 = vcmp.gt.f32.partialorder %v376, 0.0
  %vm535 = vcmp.gt.f32.partialorder %v379, 0.0
  %vm536 = vcmp.gt.f32.partialorder %v381, 0.0
  %vm537 = vcmp.gt.f32.partialorder %v384, 0.0
  %vm538 = vcmp.gt.f32.partialorder %v386, 0.0
  %vm539 = vcmp.gt.f32.partialorder %v389, 0.0
  %vm540 = vcmp.gt.f32.partialorder %v391, 0.0
  %vm541 = vcmp.gt.f32.partialorder %v394, 0.0
  %vm542 = vcmp.gt.f32.partialorder %v396, 0.0
  %vm543 = vcmp.gt.f32.partialorder %v399, 0.0
  %vm544 = vcmp.gt.f32.partialorder %v401, 0.0
  %vm545 = vcmp.gt.f32.partialorder %v404, 0.0
  %vm546 = vcmp.gt.f32.partialorder %v406, 0.0
  %vm547 = vcmp.gt.f32.partialorder %v409, 0.0
  %vm548 = vcmp.gt.f32.partialorder %v411, 0.0
  %vm549 = vcmp.gt.f32.partialorder %v414, 0.0
  %vm550 = vcmp.gt.f32.partialorder %v416, 0.0
  %vm551 = vcmp.gt.f32.partialorder %v419, 0.0
  %vm552 = vcmp.gt.f32.partialorder %v421, 0.0
  %vm553 = vcmp.gt.f32.partialorder %v424, 0.0
  %vm554 = vcmp.gt.f32.partialorder %v426, 0.0
  %vm555 = vcmp.gt.f32.partialorder %v429, 0.0
  %vm556 = vcmp.gt.f32.partialorder %v431, 0.0
  %vm557 = vcmp.gt.f32.partialorder %v434, 0.0
  %vm558 = vcmp.gt.f32.partialorder %v436, 0.0
  %vm559 = vcmp.gt.f32.partialorder %v439, 0.0
  %vm560 = vcmp.gt.f32.partialorder %v441, 0.0
  %vm561 = vcmp.gt.f32.partialorder %v444, 0.0
  %vm562 = vcmp.gt.f32.partialorder %v446, 0.0
  %vm563 = vcmp.gt.f32.partialorder %v449, 0.0
  %vm564 = vcmp.gt.f32.partialorder %v451, 0.0
  %vm565 = vcmp.gt.f32.partialorder %v454, 0.0
  %vm566 = vcmp.gt.f32.partialorder %v456, 0.0
  %vm567 = vcmp.gt.f32.partialorder %v459, 0.0
  %vm568 = vcmp.gt.f32.partialorder %v461, 0.0
  %vm569 = vcmp.gt.f32.partialorder %v464, 0.0
  %vm570 = vcmp.gt.f32.partialorder %v466, 0.0
  %vm571 = vcmp.gt.f32.partialorder %v469, 0.0
  %vm572 = vcmp.gt.f32.partialorder %v471, 0.0
  %vm573 = vcmp.gt.f32.partialorder %v474, 0.0
  %vm574 = vcmp.gt.f32.partialorder %v476, 0.0
  %vm575 = vcmp.gt.f32.partialorder %v479, 0.0
  %vm576 = vcmp.gt.f32.partialorder %v481, 0.0
  %vm577 = vcmp.gt.f32.partialorder %v484, 0.0
  %vm578 = vcmp.gt.f32.partialorder %v486, 0.0
  %vm579 = vcmp.gt.f32.partialorder %v489, 0.0
  %vm580 = vcmp.gt.f32.partialorder %v491, 0.0
  %vm581 = vcmp.gt.f32.partialorder %v494, 0.0
  %vm582 = vcmp.gt.f32.partialorder %v496, 0.0
  %vm583 = vcmp.gt.f32.partialorder %v499, 0.0
  %vm584 = vcmp.gt.f32.partialorder %v501, 0.0
  %vm585 = vcmp.gt.f32.partialorder %v504, 0.0
  %vm586 = vcmp.gt.f32.partialorder %v506, 0.0
  %vm587 = vcmp.gt.f32.partialorder %v509, 0.0
  %vm588 = vcmp.gt.f32.partialorder %v511, 0.0
  %vm589 = vcmp.gt.f32.partialorder %v514, 0.0
  %vm590 = vcmp.gt.f32.partialorder %v516, 0.0
  %vm591 = vcmp.gt.f32.partialorder %v519, 0.0
  %vm592 = vcmp.gt.f32.partialorder %v521, 0.0
  %vm593 = vcmp.gt.f32.partialorder %v524, 0.0
  %vm594 = vcmp.gt.f32.partialorder %v526, 0.0
  %vm595 = vcmp.gt.f32.partialorder %v529, 0.0
  %vm596 = vcmp.gt.f32.partialorder %v531, 0.0
  %v597 = vmul.f32 %v374, 0.2
  %v598 = vmul.f32 %v376, 0.2
  %v599 = vmul.f32 %v379, 0.2
  %v600 = vmul.f32 %v381, 0.2
  %v601 = vmul.f32 %v384, 0.2
  %v602 = vmul.f32 %v386, 0.2
  %v603 = vmul.f32 %v389, 0.2
  %v604 = vmul.f32 %v391, 0.2
  %v605 = vmul.f32 %v394, 0.2
  %v606 = vmul.f32 %v396, 0.2
  %v607 = vmul.f32 %v399, 0.2
  %v608 = vmul.f32 %v401, 0.2
  %v609 = vmul.f32 %v404, 0.2
  %v610 = vmul.f32 %v406, 0.2
  %v611 = vmul.f32 %v409, 0.2
  %v612 = vmul.f32 %v411, 0.2
  %v613 = vmul.f32 %v414, 0.2
  %v614 = vmul.f32 %v416, 0.2
  %v615 = vmul.f32 %v419, 0.2
  %v616 = vmul.f32 %v421, 0.2
  %v617 = vmul.f32 %v424, 0.2
  %v618 = vmul.f32 %v426, 0.2
  %v619 = vmul.f32 %v429, 0.2
  %v620 = vmul.f32 %v431, 0.2
  %v621 = vmul.f32 %v434, 0.2
  %v622 = vmul.f32 %v436, 0.2
  %v623 = vmul.f32 %v439, 0.2
  %v624 = vmul.f32 %v441, 0.2
  %v625 = vmul.f32 %v444, 0.2
  %v626 = vmul.f32 %v446, 0.2
  %v627 = vmul.f32 %v449, 0.2
  %v628 = vmul.f32 %v451, 0.2
  %v629 = vmul.f32 %v454, 0.2
  %v630 = vmul.f32 %v456, 0.2
  %v631 = vmul.f32 %v459, 0.2
  %v632 = vmul.f32 %v461, 0.2
  %v633 = vmul.f32 %v464, 0.2
  %v634 = vmul.f32 %v466, 0.2
  %v635 = vmul.f32 %v469, 0.2
  %v636 = vmul.f32 %v471, 0.2
  %v637 = vmul.f32 %v474, 0.2
  %v638 = vmul.f32 %v476, 0.2
  %v639 = vmul.f32 %v479, 0.2
  %v640 = vmul.f32 %v481, 0.2
  %v641 = vmul.f32 %v484, 0.2
  %v642 = vmul.f32 %v486, 0.2
  %v643 = vmul.f32 %v489, 0.2
  %v644 = vmul.f32 %v491, 0.2
  %v645 = vmul.f32 %v494, 0.2
  %v646 = vmul.f32 %v496, 0.2
  %v647 = vmul.f32 %v499, 0.2
  %v648 = vmul.f32 %v501, 0.2
  %v649 = vmul.f32 %v504, 0.2
  %v650 = vmul.f32 %v506, 0.2
  %v651 = vmul.f32 %v509, 0.2
  %v652 = vmul.f32 %v511, 0.2
  %v653 = vmul.f32 %v514, 0.2
  %v654 = vmul.f32 %v516, 0.2
  %v655 = vmul.f32 %v519, 0.2
  %v656 = vmul.f32 %v521, 0.2
  %v657 = vmul.f32 %v524, 0.2
  %v658 = vmul.f32 %v526, 0.2
  %v659 = vmul.f32 %v529, 0.2
  %v660 = vmul.f32 %v531, 0.2
  %v661 = vsel %vm533, %v374, %v597
  %v662 = vsel %vm534, %v376, %v598
  %v663 = vsel %vm535, %v379, %v599
  %v664 = vsel %vm536, %v381, %v600
  %v665 = vsel %vm537, %v384, %v601
  %v666 = vsel %vm538, %v386, %v602
  %v667 = vsel %vm539, %v389, %v603
  %v668 = vsel %vm540, %v391, %v604
  %v669 = vsel %vm541, %v394, %v605
  %v670 = vsel %vm542, %v396, %v606
  %v671 = vsel %vm543, %v399, %v607
  %v672 = vsel %vm544, %v401, %v608
  %v673 = vsel %vm545, %v404, %v609
  %v674 = vsel %vm546, %v406, %v610
  %v675 = vsel %vm547, %v409, %v611
  %v676 = vsel %vm548, %v411, %v612
  %v677 = vsel %vm549, %v414, %v613
  %v678 = vsel %vm550, %v416, %v614
  %v679 = vsel %vm551, %v419, %v615
  %v680 = vsel %vm552, %v421, %v616
  %v681 = vsel %vm553, %v424, %v617
  %v682 = vsel %vm554, %v426, %v618
  %v683 = vsel %vm555, %v429, %v619
  %v684 = vsel %vm556, %v431, %v620
  %v685 = vsel %vm557, %v434, %v621
  %v686 = vsel %vm558, %v436, %v622
  %v687 = vsel %vm559, %v439, %v623
  %v688 = vsel %vm560, %v441, %v624
  %v689 = vsel %vm561, %v444, %v625
  %v690 = vsel %vm562, %v446, %v626
  %v691 = vsel %vm563, %v449, %v627
  %v692 = vsel %vm564, %v451, %v628
  %v693 = vsel %vm565, %v454, %v629
  %v694 = vsel %vm566, %v456, %v630
  %v695 = vsel %vm567, %v459, %v631
  %v696 = vsel %vm568, %v461, %v632
  %v697 = vsel %vm569, %v464, %v633
  %v698 = vsel %vm570, %v466, %v634
  %v699 = vsel %vm571, %v469, %v635
  %v700 = vsel %vm572, %v471, %v636
  %v701 = vsel %vm573, %v474, %v637
  %v702 = vsel %vm574, %v476, %v638
  %v703 = vsel %vm575, %v479, %v639
  %v704 = vsel %vm576, %v481, %v640
  %v705 = vsel %vm577, %v484, %v641
  %v706 = vsel %vm578, %v486, %v642
  %v707 = vsel %vm579, %v489, %v643
  %v708 = vsel %vm580, %v491, %v644
  %v709 = vsel %vm581, %v494, %v645
  %v710 = vsel %vm582, %v496, %v646
  %v711 = vsel %vm583, %v499, %v647
  %v712 = vsel %vm584, %v501, %v648
  %v713 = vsel %vm585, %v504, %v649
  %v714 = vsel %vm586, %v506, %v650
  %v715 = vsel %vm587, %v509, %v651
  %v716 = vsel %vm588, %v511, %v652
  %v717 = vsel %vm589, %v514, %v653
  %v718 = vsel %vm590, %v516, %v654
  %v719 = vsel %vm591, %v519, %v655
  %v720 = vsel %vm592, %v521, %v656
  %v721 = vsel %vm593, %v524, %v657
  %v722 = vsel %vm594, %v526, %v658
  %v723 = vsel %vm595, %v529, %v659
  %v724 = vsel %vm596, %v531, %v660
  %v725 = vpack.c.bf16 %v661, %v661
  %v726 = vpack.c.bf16 %v662, %v662
  %v727 = vpack.c.bf16 %v663, %v663
  %v728 = vpack.c.bf16 %v664, %v664
  %v729 = vpack.c.bf16 %v665, %v665
  %v730 = vpack.c.bf16 %v666, %v666
  %v731 = vpack.c.bf16 %v667, %v667
  %v732 = vpack.c.bf16 %v668, %v668
  %v733 = vpack.c.bf16 %v669, %v669
  %v734 = vpack.c.bf16 %v670, %v670
  %v735 = vpack.c.bf16 %v671, %v671
  %v736 = vpack.c.bf16 %v672, %v672
  %v737 = vpack.c.bf16 %v673, %v673
  %v738 = vpack.c.bf16 %v674, %v674
  %v739 = vpack.c.bf16 %v675, %v675
  %v740 = vpack.c.bf16 %v676, %v676
  %v741 = vpack.c.bf16 %v677, %v677
  %v742 = vpack.c.bf16 %v678, %v678
  %v743 = vpack.c.bf16 %v679, %v679
  %v744 = vpack.c.bf16 %v680, %v680
  %v745 = vpack.c.bf16 %v681, %v681
  %v746 = vpack.c.bf16 %v682, %v682
  %v747 = vpack.c.bf16 %v683, %v683
  %v748 = vpack.c.bf16 %v684, %v684
  %v749 = vpack.c.bf16 %v685, %v685
  %v750 = vpack.c.bf16 %v686, %v686
  %v751 = vpack.c.bf16 %v687, %v687
  %v752 = vpack.c.bf16 %v688, %v688
  %v753 = vpack.c.bf16 %v689, %v689
  %v754 = vpack.c.bf16 %v690, %v690
  %v755 = vpack.c.bf16 %v691, %v691
  %v756 = vpack.c.bf16 %v692, %v692
  %v757 = vpack.c.bf16 %v693, %v693
  %v758 = vpack.c.bf16 %v694, %v694
  %v759 = vpack.c.bf16 %v695, %v695
  %v760 = vpack.c.bf16 %v696, %v696
  %v761 = vpack.c.bf16 %v697, %v697
  %v762 = vpack.c.bf16 %v698, %v698
  %v763 = vpack.c.bf16 %v699, %v699
  %v764 = vpack.c.bf16 %v700, %v700
  %v765 = vpack.c.bf16 %v701, %v701
  %v766 = vpack.c.bf16 %v702, %v702
  %v767 = vpack.c.bf16 %v703, %v703
  %v768 = vpack.c.bf16 %v704, %v704
  %v769 = vpack.c.bf16 %v705, %v705
  %v770 = vpack.c.bf16 %v706, %v706
  %v771 = vpack.c.bf16 %v707, %v707
  %v772 = vpack.c.bf16 %v708, %v708
  %v773 = vpack.c.bf16 %v709, %v709
  %v774 = vpack.c.bf16 %v710, %v710
  %v775 = vpack.c.bf16 %v711, %v711
  %v776 = vpack.c.bf16 %v712, %v712
  %v777 = vpack.c.bf16 %v713, %v713
  %v778 = vpack.c.bf16 %v714, %v714
  %v779 = vpack.c.bf16 %v715, %v715
  %v780 = vpack.c.bf16 %v716, %v716
  %v781 = vpack.c.bf16 %v717, %v717
  %v782 = vpack.c.bf16 %v718, %v718
  %v783 = vpack.c.bf16 %v719, %v719
  %v784 = vpack.c.bf16 %v720, %v720
  %v785 = vpack.c.bf16 %v721, %v721
  %v786 = vpack.c.bf16 %v722, %v722
  %v787 = vpack.c.bf16 %v723, %v723
  %v788 = vpack.c.bf16 %v724, %v724
  %vm789 = vcmask 125952
  %790 = vst.msk [vmem:[%s3] sm:$0xf] %vm789, %v725
  %791 = vst.msk [vmem:[%s3 + $0x4] sm:$0xf] %vm789, %v726
  %792 = vst.msk [vmem:[%s3 + $0x8] sm:$0xf] %vm789, %v727
  %793 = vst.msk [vmem:[%s3 + $0xc] sm:$0xf] %vm789, %v728
  %794 = vst.msk [vmem:[%s3 + $0x10] sm:$0xf] %vm789, %v729
  %795 = vst.msk [vmem:[%s3 + $0x14] sm:$0xf] %vm789, %v730
  %796 = vst.msk [vmem:[%s3 + $0x18] sm:$0xf] %vm789, %v731
  %797 = vst.msk [vmem:[%s3 + $0x1c] sm:$0xf] %vm789, %v732
  %798 = vst.msk [vmem:[%s3 + $0x20] sm:$0xf] %vm789, %v733
  %799 = vst.msk [vmem:[%s3 + $0x24] sm:$0xf] %vm789, %v734
  %800 = vst.msk [vmem:[%s3 + $0x28] sm:$0xf] %vm789, %v735
  %801 = vst.msk [vmem:[%s3 + $0x2c] sm:$0xf] %vm789, %v736
  %802 = vst.msk [vmem:[%s3 + $0x30] sm:$0xf] %vm789, %v737
  %803 = vst.msk [vmem:[%s3 + $0x34] sm:$0xf] %vm789, %v738
  %804 = vst.msk [vmem:[%s3 + $0x38] sm:$0xf] %vm789, %v739
  %805 = vst.msk [vmem:[%s3 + $0x3c] sm:$0xf] %vm789, %v740
  %806 = vst.msk [vmem:[%s3 + $0x40] sm:$0xf] %vm789, %v741
  %807 = vst.msk [vmem:[%s3 + $0x44] sm:$0xf] %vm789, %v742
  %808 = vst.msk [vmem:[%s3 + $0x48] sm:$0xf] %vm789, %v743
  %809 = vst.msk [vmem:[%s3 + $0x4c] sm:$0xf] %vm789, %v744
  %810 = vst.msk [vmem:[%s3 + $0x50] sm:$0xf] %vm789, %v745
  %811 = vst.msk [vmem:[%s3 + $0x54] sm:$0xf] %vm789, %v746
  %812 = vst.msk [vmem:[%s3 + $0x58] sm:$0xf] %vm789, %v747
  %813 = vst.msk [vmem:[%s3 + $0x5c] sm:$0xf] %vm789, %v748
  %814 = vst.msk [vmem:[%s3 + $0x60] sm:$0xf] %vm789, %v749
  %815 = vst.msk [vmem:[%s3 + $0x64] sm:$0xf] %vm789, %v750
  %816 = vst.msk [vmem:[%s3 + $0x68] sm:$0xf] %vm789, %v751
  %817 = vst.msk [vmem:[%s3 + $0x6c] sm:$0xf] %vm789, %v752
  %818 = vst.msk [vmem:[%s3 + $0x70] sm:$0xf] %vm789, %v753
  %819 = vst.msk [vmem:[%s3 + $0x74] sm:$0xf] %vm789, %v754
  %820 = vst.msk [vmem:[%s3 + $0x78] sm:$0xf] %vm789, %v755
  %821 = vst.msk [vmem:[%s3 + $0x7c] sm:$0xf] %vm789, %v756
  %822 = vst.msk [vmem:[%s3 + $0x80] sm:$0xf] %vm789, %v757
  %823 = vst.msk [vmem:[%s3 + $0x84] sm:$0xf] %vm789, %v758
  %824 = vst.msk [vmem:[%s3 + $0x88] sm:$0xf] %vm789, %v759
  %825 = vst.msk [vmem:[%s3 + $0x8c] sm:$0xf] %vm789, %v760
  %826 = vst.msk [vmem:[%s3 + $0x90] sm:$0xf] %vm789, %v761
  %827 = vst.msk [vmem:[%s3 + $0x94] sm:$0xf] %vm789, %v762
  %828 = vst.msk [vmem:[%s3 + $0x98] sm:$0xf] %vm789, %v763
  %829 = vst.msk [vmem:[%s3 + $0x9c] sm:$0xf] %vm789, %v764
  %830 = vst.msk [vmem:[%s3 + $0xa0] sm:$0xf] %vm789, %v765
  %831 = vst.msk [vmem:[%s3 + $0xa4] sm:$0xf] %vm789, %v766
  %832 = vst.msk [vmem:[%s3 + $0xa8] sm:$0xf] %vm789, %v767
  %833 = vst.msk [vmem:[%s3 + $0xac] sm:$0xf] %vm789, %v768
  %834 = vst.msk [vmem:[%s3 + $0xb0] sm:$0xf] %vm789, %v769
  %835 = vst.msk [vmem:[%s3 + $0xb4] sm:$0xf] %vm789, %v770
  %836 = vst.msk [vmem:[%s3 + $0xb8] sm:$0xf] %vm789, %v771
  %837 = vst.msk [vmem:[%s3 + $0xbc] sm:$0xf] %vm789, %v772
  %838 = vst.msk [vmem:[%s3 + $0xc0] sm:$0xf] %vm789, %v773
  %839 = vst.msk [vmem:[%s3 + $0xc4] sm:$0xf] %vm789, %v774
  %840 = vst.msk [vmem:[%s3 + $0xc8] sm:$0xf] %vm789, %v775
  %841 = vst.msk [vmem:[%s3 + $0xcc] sm:$0xf] %vm789, %v776
  %842 = vst.msk [vmem:[%s3 + $0xd0] sm:$0xf] %vm789, %v777
  %843 = vst.msk [vmem:[%s3 + $0xd4] sm:$0xf] %vm789, %v778
  %844 = vst.msk [vmem:[%s3 + $0xd8] sm:$0xf] %vm789, %v779
  %845 = vst.msk [vmem:[%s3 + $0xdc] sm:$0xf] %vm789, %v780
  %846 = vst.msk [vmem:[%s3 + $0xe0] sm:$0xf] %vm789, %v781
  %847 = vst.msk [vmem:[%s3 + $0xe4] sm:$0xf] %vm789, %v782
  %848 = vst.msk [vmem:[%s3 + $0xe8] sm:$0xf] %vm789, %v783
  %849 = vst.msk [vmem:[%s3 + $0xec] sm:$0xf] %vm789, %v784
  %850 = vst.msk [vmem:[%s3 + $0xf0] sm:$0xf] %vm789, %v785
  %851 = vst.msk [vmem:[%s3 + $0xf4] sm:$0xf] %vm789, %v786
  %852 = vst.msk [vmem:[%s3 + $0xf8] sm:$0xf] %vm789, %v787
  %853 = vst.msk [vmem:[%s3 + $0xfc] sm:$0xf] %vm789, %v788
  // Predicated region
  $region14: #{discriminator_forward.5} parent=0 // pred_check
    _
  $region15: #{discriminator_forward.5} parent=0 // pred_check_branch
    %855 = sbr.rel (0) target = $region17
  $region16: #{discriminator_forward.5} parent=0 // pred_region
    _
  $region17: #{discriminator_forward.5} parent=0 // pred_fallthru
    _
  // Predicated region
  $region18: #{discriminator_forward.5} parent=0 // pred_check
    _
  $region19: #{discriminator_forward.5} parent=0 // pred_check_branch
    %857 = sbr.rel (0) target = $region21
  $region20: #{discriminator_forward.5} parent=0 // pred_region
    _
  $region21: #{discriminator_forward.5} parent=0 // pred_fallthru
    _

// kernel: discriminator_forward.6
$region0: #{discriminator_forward.6}
  #allocation0 [shape = 'u32[]', space=smem, size = 0x4, offset = 0x4, fixed_abs, tag = 'smem constant byte address 0x4 - core index']
  #allocation1 [shape = 'u32[72,128]{1,0:T(1,128)}', space=vmem, size = 0x9000, scoped, tag = 'internal scratch']
  %s0 = inlined_call_operand.vmem [shape: bf16[128,256], index: 0, kind: input, shape index: {}]
  %s1 = inlined_call_operand.vmem [shape: bf16[256,32], index: 1, kind: input, shape index: {}]
  %s2 = inlined_call_operand.vmem [shape: f32[1,32], index: 2, kind: input, shape index: {}]
  %s3 = inlined_call_operand.vmem [shape: bf16[128,32], index: 3, kind: output, shape index: {}]
  %s4 = sld [smem:[#allocation0]]
  $region22: #{discriminator_forward.6} parent=0
    _
  %s6 = ssub.s32 1, %s4
  %s7 = scalar_select 0, %s6, %s4
  // Predicated region
  $region2: #{discriminator_forward.6} parent=0 // pred_check
    _
  $region3: #{discriminator_forward.6} parent=0 // pred_check_branch
    %9 = sbr.rel (0) target = $region5
  $region4: #{discriminator_forward.6} parent=0 // pred_region
    _
  $region5: #{discriminator_forward.6} parent=0 // pred_fallthru
    _
  // Predicated region
  $region6: #{discriminator_forward.6} parent=0 // pred_check
    _
  $region7: #{discriminator_forward.6} parent=0 // pred_check_branch
    %11 = sbr.rel (0) target = $region9
  $region8: #{discriminator_forward.6} parent=0 // pred_region
    _
  $region9: #{discriminator_forward.6} parent=0 // pred_fallthru
    _
  // Predicated region
  $region10: #{discriminator_forward.6} parent=0 // pred_check
    _
  $region11: #{discriminator_forward.6} parent=0 // pred_check_branch
    %13 = sbr.rel (0) target = $region13
  $region12: #{discriminator_forward.6} parent=0 // pred_region
    _
  $region13: #{discriminator_forward.6} parent=0 // pred_fallthru
    _
  %v14 = vld [vmem:[%s0] sm:$0xff]
  %v15 = vld [vmem:[%s0 + $0x8] sm:$0xff]
  %v16 = vld [vmem:[%s0 + $0x10] sm:$0xff]
  %v17 = vld [vmem:[%s0 + $0x18] sm:$0xff]
  %v18 = vld [vmem:[%s0 + $0x20] sm:$0xff]
  %v19 = vld [vmem:[%s0 + $0x28] sm:$0xff]
  %v20 = vld [vmem:[%s0 + $0x30] sm:$0xff]
  %v21 = vld [vmem:[%s0 + $0x38] sm:$0xff]
  %v22 = vld [vmem:[%s0 + $0x40] sm:$0xff]
  %v23 = vld [vmem:[%s0 + $0x48] sm:$0xff]
  %v24 = vld [vmem:[%s0 + $0x50] sm:$0xff]
  %v25 = vld [vmem:[%s0 + $0x58] sm:$0xff]
  %v26 = vld [vmem:[%s0 + $0x60] sm:$0xff]
  %v27 = vld [vmem:[%s0 + $0x68] sm:$0xff]
  %v28 = vld [vmem:[%s0 + $0x70] sm:$0xff]
  %v29 = vld [vmem:[%s0 + $0x78] sm:$0xff]
  %v30 = vld [vmem:[%s1] sm:$0xf]
  %v31 = vld [vmem:[%s1 + $0x4] sm:$0xf]
  %v32 = vld [vmem:[%s1 + $0x8] sm:$0xf]
  %v33 = vld [vmem:[%s1 + $0xc] sm:$0xf]
  %v34 = vld [vmem:[%s1 + $0x10] sm:$0xf]
  %v35 = vld [vmem:[%s1 + $0x14] sm:$0xf]
  %v36 = vld [vmem:[%s1 + $0x18] sm:$0xf]
  %v37 = vld [vmem:[%s1 + $0x1c] sm:$0xf]
  %v38 = vld [vmem:[%s1 + $0x20] sm:$0xf]
  %v39 = vld [vmem:[%s1 + $0x24] sm:$0xf]
  %v40 = vld [vmem:[%s1 + $0x28] sm:$0xf]
  %v41 = vld [vmem:[%s1 + $0x2c] sm:$0xf]
  %v42 = vld [vmem:[%s1 + $0x30] sm:$0xf]
  %v43 = vld [vmem:[%s1 + $0x34] sm:$0xf]
  %v44 = vld [vmem:[%s1 + $0x38] sm:$0xf]
  %v45 = vld [vmem:[%s1 + $0x3c] sm:$0xf]
  %v46 = vld [vmem:[%s1 + $0x40] sm:$0xf]
  %v47 = vld [vmem:[%s1 + $0x44] sm:$0xf]
  %v48 = vld [vmem:[%s1 + $0x48] sm:$0xf]
  %v49 = vld [vmem:[%s1 + $0x4c] sm:$0xf]
  %v50 = vld [vmem:[%s1 + $0x50] sm:$0xf]
  %v51 = vld [vmem:[%s1 + $0x54] sm:$0xf]
  %v52 = vld [vmem:[%s1 + $0x58] sm:$0xf]
  %v53 = vld [vmem:[%s1 + $0x5c] sm:$0xf]
  %v54 = vld [vmem:[%s1 + $0x60] sm:$0xf]
  %v55 = vld [vmem:[%s1 + $0x64] sm:$0xf]
  %v56 = vld [vmem:[%s1 + $0x68] sm:$0xf]
  %v57 = vld [vmem:[%s1 + $0x6c] sm:$0xf]
  %v58 = vld [vmem:[%s1 + $0x70] sm:$0xf]
  %v59 = vld [vmem:[%s1 + $0x74] sm:$0xf]
  %v60 = vld [vmem:[%s1 + $0x78] sm:$0xf]
  %v61 = vld [vmem:[%s1 + $0x7c] sm:$0xf]
  %v62 = vld [vmem:[%s2] sm:$0x1]
  %v64 = vperm.slane %v62, 0
  %v82 = vunpack.c.l.b16 %v14
  %v83 = vunpack.c.h.b16 %v14
  %v84 = vunpack.c.l.b16 %v15
  %v85 = vunpack.c.h.b16 %v15
  %v86 = vunpack.c.l.b16 %v16
  %v87 = vunpack.c.h.b16 %v16
  %v88 = vunpack.c.l.b16 %v17
  %v89 = vunpack.c.h.b16 %v17
  %v90 = vunpack.c.l.b16 %v18
  %v91 = vunpack.c.h.b16 %v18
  %v92 = vunpack.c.l.b16 %v19
  %v93 = vunpack.c.h.b16 %v19
  %v94 = vunpack.c.l.b16 %v20
  %v95 = vunpack.c.h.b16 %v20
  %v96 = vunpack.c.l.b16 %v21
  %v97 = vunpack.c.h.b16 %v21
  %v98 = vunpack.c.l.b16 %v22
  %v99 = vunpack.c.h.b16 %v22
  %v100 = vunpack.c.l.b16 %v23
  %v101 = vunpack.c.h.b16 %v23
  %v102 = vunpack.c.l.b16 %v24
  %v103 = vunpack.c.h.b16 %v24
  %v104 = vunpack.c.l.b16 %v25
  %v105 = vunpack.c.h.b16 %v25
  %v106 = vunpack.c.l.b16 %v26
  %v107 = vunpack.c.h.b16 %v26
  %v108 = vunpack.c.l.b16 %v27
  %v109 = vunpack.c.h.b16 %v27
  %v110 = vunpack.c.l.b16 %v28
  %v111 = vunpack.c.h.b16 %v28
  %v112 = vunpack.c.l.b16 %v29
  %v113 = vunpack.c.h.b16 %v29
  %v114 = vpack.c.b16 %v84, %v82
  %v115 = vpack.c.b16 %v85, %v83
  %v116 = vpack.c.b16 %v88, %v86
  %v117 = vpack.c.b16 %v89, %v87
  %v118 = vpack.c.b16 %v92, %v90
  %v119 = vpack.c.b16 %v93, %v91
  %v120 = vpack.c.b16 %v96, %v94
  %v121 = vpack.c.b16 %v97, %v95
  %v122 = vpack.c.b16 %v100, %v98
  %v123 = vpack.c.b16 %v101, %v99
  %v124 = vpack.c.b16 %v104, %v102
  %v125 = vpack.c.b16 %v105, %v103
  %v126 = vpack.c.b16 %v108, %v106
  %v127 = vpack.c.b16 %v109, %v107
  %v128 = vpack.c.b16 %v112, %v110
  %v129 = vpack.c.b16 %v113, %v111
  %v178 = vunpack.c.l.b16 %v30
  %v179 = vunpack.c.l.b16 %v31
  %v180 = vunpack.c.l.b16 %v32
  %v181 = vunpack.c.l.b16 %v33
  %v182 = vunpack.c.l.b16 %v34
  %v183 = vunpack.c.l.b16 %v35
  %v184 = vunpack.c.l.b16 %v36
  %v185 = vunpack.c.l.b16 %v37
  %v186 = vunpack.c.l.b16 %v38
  %v187 = vunpack.c.l.b16 %v39
  %v188 = vunpack.c.l.b16 %v40
  %v189 = vunpack.c.l.b16 %v41
  %v190 = vunpack.c.l.b16 %v42
  %v191 = vunpack.c.l.b16 %v43
  %v192 = vunpack.c.l.b16 %v44
  %v193 = vunpack.c.l.b16 %v45
  %v194 = vunpack.c.l.b16 %v46
  %v195 = vunpack.c.l.b16 %v47
  %v196 = vunpack.c.l.b16 %v48
  %v197 = vunpack.c.l.b16 %v49
  %v198 = vunpack.c.l.b16 %v50
  %v199 = vunpack.c.l.b16 %v51
  %v200 = vunpack.c.l.b16 %v52
  %v201 = vunpack.c.l.b16 %v53
  %v202 = vunpack.c.l.b16 %v54
  %v203 = vunpack.c.l.b16 %v55
  %v204 = vunpack.c.l.b16 %v56
  %v205 = vunpack.c.l.b16 %v57
  %v206 = vunpack.c.l.b16 %v58
  %v207 = vunpack.c.l.b16 %v59
  %v208 = vunpack.c.l.b16 %v60
  %v209 = vunpack.c.l.b16 %v61
  %v210 = vpack.c.b16 %v179, %v178
  %v211 = vpack.c.b16 %v181, %v180
  %v212 = vpack.c.b16 %v183, %v182
  %v213 = vpack.c.b16 %v185, %v184
  %v214 = vpack.c.b16 %v187, %v186
  %v215 = vpack.c.b16 %v189, %v188
  %v216 = vpack.c.b16 %v191, %v190
  %v217 = vpack.c.b16 %v193, %v192
  %v218 = vpack.c.b16 %v195, %v194
  %v219 = vpack.c.b16 %v197, %v196
  %v220 = vpack.c.b16 %v199, %v198
  %v221 = vpack.c.b16 %v201, %v200
  %v222 = vpack.c.b16 %v203, %v202
  %v223 = vpack.c.b16 %v205, %v204
  %v224 = vpack.c.b16 %v207, %v206
  %v225 = vpack.c.b16 %v209, %v208
  %242 = vmatpush.bf16.msra.mxu0 %v217
  %243 = vmatpush.bf16.msra.mxu0 %v216
  %244 = vmatpush.bf16.msra.mxu0 %v215
  %245 = vmatpush.bf16.msra.mxu0 %v214
  %246 = vmatpush.bf16.msra.mxu0 %v213
  %247 = vmatpush.bf16.msra.mxu0 %v212
  %248 = vmatpush.bf16.msra.mxu0 %v211
  %249 = vmatpush.bf16.msra.mxu0 %v210
  %250 = vmatmul.bf16.gmra.mxu0 %v114
  %v251 = vpop.f32.mrf.mxu0
  %v252 = vadd.f32 %v64, %v251
  %v253 = vpop.f32.mrf.mxu0
  %v254 = vadd.f32 %v64, %v253
  %255 = vmatmul.bf16.gmra.mxu0 %v116
  %v256 = vpop.f32.mrf.mxu0
  %v257 = vadd.f32 %v64, %v256
  %v258 = vpop.f32.mrf.mxu0
  %v259 = vadd.f32 %v64, %v258
  %260 = vmatmul.bf16.gmra.mxu0 %v118
  %v261 = vpop.f32.mrf.mxu0
  %v262 = vadd.f32 %v64, %v261
  %v263 = vpop.f32.mrf.mxu0
  %v264 = vadd.f32 %v64, %v263
  %265 = vmatmul.bf16.gmra.mxu0 %v120
  %v266 = vpop.f32.mrf.mxu0
  %v267 = vadd.f32 %v64, %v266
  %v268 = vpop.f32.mrf.mxu0
  %v269 = vadd.f32 %v64, %v268
  %270 = vmatmul.bf16.gmra.mxu0 %v122
  %v271 = vpop.f32.mrf.mxu0
  %v272 = vadd.f32 %v64, %v271
  %v273 = vpop.f32.mrf.mxu0
  %v274 = vadd.f32 %v64, %v273
  %275 = vmatmul.bf16.gmra.mxu0 %v124
  %v276 = vpop.f32.mrf.mxu0
  %v277 = vadd.f32 %v64, %v276
  %v278 = vpop.f32.mrf.mxu0
  %v279 = vadd.f32 %v64, %v278
  %280 = vmatmul.bf16.gmra.mxu0 %v126
  %v281 = vpop.f32.mrf.mxu0
  %v282 = vadd.f32 %v64, %v281
  %v283 = vpop.f32.mrf.mxu0
  %v284 = vadd.f32 %v64, %v283
  %285 = vmatmul.bf16.gmra.mxu0 %v128
  %v286 = vpop.f32.mrf.mxu0
  %v287 = vadd.f32 %v64, %v286
  %v288 = vpop.f32.mrf.mxu0
  %v289 = vadd.f32 %v64, %v288
  %290 = vdwg.mxu0
  %291 = vmatpush.bf16.msra.mxu0 %v225
  %292 = vmatpush.bf16.msra.mxu0 %v224
  %293 = vmatpush.bf16.msra.mxu0 %v223
  %294 = vmatpush.bf16.msra.mxu0 %v222
  %295 = vmatpush.bf16.msra.mxu0 %v221
  %296 = vmatpush.bf16.msra.mxu0 %v220
  %297 = vmatpush.bf16.msra.mxu0 %v219
  %298 = vmatpush.bf16.msra.mxu0 %v218
  %299 = vmatmul.bf16.gmra.mxu0 %v115
  %v300 = vpop.f32.mrf.mxu0
  %v301 = vadd.f32 %v252, %v300
  %v302 = vpop.f32.mrf.mxu0
  %v303 = vadd.f32 %v254, %v302
  %304 = vmatmul.bf16.gmra.mxu0 %v117
  %v305 = vpop.f32.mrf.mxu0
  %v306 = vadd.f32 %v257, %v305
  %v307 = vpop.f32.mrf.mxu0
  %v308 = vadd.f32 %v259, %v307
  %309 = vmatmul.bf16.gmra.mxu0 %v119
  %v310 = vpop.f32.mrf.mxu0
  %v311 = vadd.f32 %v262, %v310
  %v312 = vpop.f32.mrf.mxu0
  %v313 = vadd.f32 %v264, %v312
  %314 = vmatmul.bf16.gmra.mxu0 %v121
  %v315 = vpop.f32.mrf.mxu0
  %v316 = vadd.f32 %v267, %v315
  %v317 = vpop.f32.mrf.mxu0
  %v318 = vadd.f32 %v269, %v317
  %319 = vmatmul.bf16.gmra.mxu0 %v123
  %v320 = vpop.f32.mrf.mxu0
  %v321 = vadd.f32 %v272, %v320
  %v322 = vpop.f32.mrf.mxu0
  %v323 = vadd.f32 %v274, %v322
  %324 = vmatmul.bf16.gmra.mxu0 %v125
  %v325 = vpop.f32.mrf.mxu0
  %v326 = vadd.f32 %v277, %v325
  %v327 = vpop.f32.mrf.mxu0
  %v328 = vadd.f32 %v279, %v327
  %329 = vmatmul.bf16.gmra.mxu0 %v127
  %v330 = vpop.f32.mrf.mxu0
  %v331 = vadd.f32 %v282, %v330
  %v332 = vpop.f32.mrf.mxu0
  %v333 = vadd.f32 %v284, %v332
  %334 = vmatmul.bf16.gmra.mxu0 %v129
  %v335 = vpop.f32.mrf.mxu0
  %v336 = vadd.f32 %v287, %v335
  %v337 = vpop.f32.mrf.mxu0
  %v338 = vadd.f32 %v289, %v337
  %339 = vdwg.mxu0
  %vm340 = vcmp.gt.f32.partialorder %v301, 0.0
  %vm341 = vcmp.gt.f32.partialorder %v303, 0.0
  %vm342 = vcmp.gt.f32.partialorder %v306, 0.0
  %vm343 = vcmp.gt.f32.partialorder %v308, 0.0
  %vm344 = vcmp.gt.f32.partialorder %v311, 0.0
  %vm345 = vcmp.gt.f32.partialorder %v313, 0.0
  %vm346 = vcmp.gt.f32.partialorder %v316, 0.0
  %vm347 = vcmp.gt.f32.partialorder %v318, 0.0
  %vm348 = vcmp.gt.f32.partialorder %v321, 0.0
  %vm349 = vcmp.gt.f32.partialorder %v323, 0.0
  %vm350 = vcmp.gt.f32.partialorder %v326, 0.0
  %vm351 = vcmp.gt.f32.partialorder %v328, 0.0
  %vm352 = vcmp.gt.f32.partialorder %v331, 0.0
  %vm353 = vcmp.gt.f32.partialorder %v333, 0.0
  %vm354 = vcmp.gt.f32.partialorder %v336, 0.0
  %vm355 = vcmp.gt.f32.partialorder %v338, 0.0
  %v356 = vmul.f32 %v301, 0.2
  %v357 = vmul.f32 %v303, 0.2
  %v358 = vmul.f32 %v306, 0.2
  %v359 = vmul.f32 %v308, 0.2
  %v360 = vmul.f32 %v311, 0.2
  %v361 = vmul.f32 %v313, 0.2
  %v362 = vmul.f32 %v316, 0.2
  %v363 = vmul.f32 %v318, 0.2
  %v364 = vmul.f32 %v321, 0.2
  %v365 = vmul.f32 %v323, 0.2
  %v366 = vmul.f32 %v326, 0.2
  %v367 = vmul.f32 %v328, 0.2
  %v368 = vmul.f32 %v331, 0.2
  %v369 = vmul.f32 %v333, 0.2
  %v370 = vmul.f32 %v336, 0.2
  %v371 = vmul.f32 %v338, 0.2
  %v372 = vsel %vm340, %v301, %v356
  %v373 = vsel %vm341, %v303, %v357
  %v374 = vsel %vm342, %v306, %v358
  %v375 = vsel %vm343, %v308, %v359
  %v376 = vsel %vm344, %v311, %v360
  %v377 = vsel %vm345, %v313, %v361
  %v378 = vsel %vm346, %v316, %v362
  %v379 = vsel %vm347, %v318, %v363
  %v380 = vsel %vm348, %v321, %v364
  %v381 = vsel %vm349, %v323, %v365
  %v382 = vsel %vm350, %v326, %v366
  %v383 = vsel %vm351, %v328, %v367
  %v384 = vsel %vm352, %v331, %v368
  %v385 = vsel %vm353, %v333, %v369
  %v386 = vsel %vm354, %v336, %v370
  %v387 = vsel %vm355, %v338, %v371
  %v388 = vpack.c.bf16 %v372, %v372
  %v389 = vpack.c.bf16 %v373, %v373
  %v390 = vpack.c.bf16 %v374, %v374
  %v391 = vpack.c.bf16 %v375, %v375
  %v392 = vpack.c.bf16 %v376, %v376
  %v393 = vpack.c.bf16 %v377, %v377
  %v394 = vpack.c.bf16 %v378, %v378
  %v395 = vpack.c.bf16 %v379, %v379
  %v396 = vpack.c.bf16 %v380, %v380
  %v397 = vpack.c.bf16 %v381, %v381
  %v398 = vpack.c.bf16 %v382, %v382
  %v399 = vpack.c.bf16 %v383, %v383
  %v400 = vpack.c.bf16 %v384, %v384
  %v401 = vpack.c.bf16 %v385, %v385
  %v402 = vpack.c.bf16 %v386, %v386
  %v403 = vpack.c.bf16 %v387, %v387
  %vm404 = vcmask 257024
  %405 = vst.msk [vmem:[%s3] sm:$0xf] %vm404, %v388
  %406 = vst.msk [vmem:[%s3 + $0x4] sm:$0xf] %vm404, %v389
  %407 = vst.msk [vmem:[%s3 + $0x8] sm:$0xf] %vm404, %v390
  %408 = vst.msk [vmem:[%s3 + $0xc] sm:$0xf] %vm404, %v391
  %409 = vst.msk [vmem:[%s3 + $0x10] sm:$0xf] %vm404, %v392
  %410 = vst.msk [vmem:[%s3 + $0x14] sm:$0xf] %vm404, %v393
  %411 = vst.msk [vmem:[%s3 + $0x18] sm:$0xf] %vm404, %v394
  %412 = vst.msk [vmem:[%s3 + $0x1c] sm:$0xf] %vm404, %v395
  %413 = vst.msk [vmem:[%s3 + $0x20] sm:$0xf] %vm404, %v396
  %414 = vst.msk [vmem:[%s3 + $0x24] sm:$0xf] %vm404, %v397
  %415 = vst.msk [vmem:[%s3 + $0x28] sm:$0xf] %vm404, %v398
  %416 = vst.msk [vmem:[%s3 + $0x2c] sm:$0xf] %vm404, %v399
  %417 = vst.msk [vmem:[%s3 + $0x30] sm:$0xf] %vm404, %v400
  %418 = vst.msk [vmem:[%s3 + $0x34] sm:$0xf] %vm404, %v401
  %419 = vst.msk [vmem:[%s3 + $0x38] sm:$0xf] %vm404, %v402
  %420 = vst.msk [vmem:[%s3 + $0x3c] sm:$0xf] %vm404, %v403
  // Predicated region
  $region14: #{discriminator_forward.6} parent=0 // pred_check
    _
  $region15: #{discriminator_forward.6} parent=0 // pred_check_branch
    %422 = sbr.rel (0) target = $region17
  $region16: #{discriminator_forward.6} parent=0 // pred_region
    _
  $region17: #{discriminator_forward.6} parent=0 // pred_fallthru
    _
  // Predicated region
  $region18: #{discriminator_forward.6} parent=0 // pred_check
    _
  $region19: #{discriminator_forward.6} parent=0 // pred_check_branch
    %424 = sbr.rel (0) target = $region21
  $region20: #{discriminator_forward.6} parent=0 // pred_region
    _
  $region21: #{discriminator_forward.6} parent=0 // pred_fallthru
    _

// kernel: discriminator_forward.7
$region0: #{discriminator_forward.7}
  #allocation0 [shape = 'u32[]', space=smem, size = 0x4, offset = 0x4, fixed_abs, tag = 'smem constant byte address 0x4 - core index']
  #allocation1 [shape = 'u32[72,128]{1,0:T(1,128)}', space=vmem, size = 0x9000, scoped, tag = 'internal scratch']
  %s0 = inlined_call_operand.vmem [shape: bf16[32,512], index: 0, kind: input, shape index: {}]
  %s1 = inlined_call_operand.vmem [shape: bf16[512,64], index: 1, kind: input, shape index: {}]
  %s2 = inlined_call_operand.vmem [shape: f32[1,64], index: 2, kind: input, shape index: {}]
  %s3 = inlined_call_operand.vmem [shape: bf16[32,64], index: 3, kind: output, shape index: {}]
  %s4 = sld [smem:[#allocation0]]
  $region22: #{discriminator_forward.7} parent=0
    _
  %s6 = ssub.s32 1, %s4
  %s7 = scalar_select 0, %s6, %s4
  // Predicated region
  $region2: #{discriminator_forward.7} parent=0 // pred_check
    _
  $region3: #{discriminator_forward.7} parent=0 // pred_check_branch
    %9 = sbr.rel (0) target = $region5
  $region4: #{discriminator_forward.7} parent=0 // pred_region
    _
  $region5: #{discriminator_forward.7} parent=0 // pred_fallthru
    _
  // Predicated region
  $region6: #{discriminator_forward.7} parent=0 // pred_check
    _
  $region7: #{discriminator_forward.7} parent=0 // pred_check_branch
    %11 = sbr.rel (0) target = $region9
  $region8: #{discriminator_forward.7} parent=0 // pred_region
    _
  $region9: #{discriminator_forward.7} parent=0 // pred_fallthru
    _
  // Predicated region
  $region10: #{discriminator_forward.7} parent=0 // pred_check
    _
  $region11: #{discriminator_forward.7} parent=0 // pred_check_branch
    %13 = sbr.rel (0) target = $region13
  $region12: #{discriminator_forward.7} parent=0 // pred_region
    _
  $region13: #{discriminator_forward.7} parent=0 // pred_fallthru
    _
  %v14 = vld [vmem:[%s0] sm:$0xff]
  %v15 = vld [vmem:[%s0 + $0x8] sm:$0xff]
  %v16 = vld [vmem:[%s0 + $0x10] sm:$0xff]
  %v17 = vld [vmem:[%s0 + $0x18] sm:$0xff]
  %v18 = vld [vmem:[%s0 + $0x20] sm:$0xff]
  %v19 = vld [vmem:[%s0 + $0x28] sm:$0xff]
  %v20 = vld [vmem:[%s0 + $0x30] sm:$0xff]
  %v21 = vld [vmem:[%s0 + $0x38] sm:$0xff]
  %v22 = vld [vmem:[%s1] sm:$0xf]
  %v23 = vld [vmem:[%s1 + $0x4] sm:$0xf]
  %v24 = vld [vmem:[%s1 + $0x8] sm:$0xf]
  %v25 = vld [vmem:[%s1 + $0xc] sm:$0xf]
  %v26 = vld [vmem:[%s1 + $0x10] sm:$0xf]
  %v27 = vld [vmem:[%s1 + $0x14] sm:$0xf]
  %v28 = vld [vmem:[%s1 + $0x18] sm:$0xf]
  %v29 = vld [vmem:[%s1 + $0x1c] sm:$0xf]
  %v30 = vld [vmem:[%s1 + $0x20] sm:$0xf]
  %v31 = vld [vmem:[%s1 + $0x24] sm:$0xf]
  %v32 = vld [vmem:[%s1 + $0x28] sm:$0xf]
  %v33 = vld [vmem:[%s1 + $0x2c] sm:$0xf]
  %v34 = vld [vmem:[%s1 + $0x30] sm:$0xf]
  %v35 = vld [vmem:[%s1 + $0x34] sm:$0xf]
  %v36 = vld [vmem:[%s1 + $0x38] sm:$0xf]
  %v37 = vld [vmem:[%s1 + $0x3c] sm:$0xf]
  %v38 = vld [vmem:[%s1 + $0x40] sm:$0xf]
  %v39 = vld [vmem:[%s1 + $0x44] sm:$0xf]
  %v40 = vld [vmem:[%s1 + $0x48] sm:$0xf]
  %v41 = vld [vmem:[%s1 + $0x4c] sm:$0xf]
  %v42 = vld [vmem:[%s1 + $0x50] sm:$0xf]
  %v43 = vld [vmem:[%s1 + $0x54] sm:$0xf]
  %v44 = vld [vmem:[%s1 + $0x58] sm:$0xf]
  %v45 = vld [vmem:[%s1 + $0x5c] sm:$0xf]
  %v46 = vld [vmem:[%s1 + $0x60] sm:$0xf]
  %v47 = vld [vmem:[%s1 + $0x64] sm:$0xf]
  %v48 = vld [vmem:[%s1 + $0x68] sm:$0xf]
  %v49 = vld [vmem:[%s1 + $0x6c] sm:$0xf]
  %v50 = vld [vmem:[%s1 + $0x70] sm:$0xf]
  %v51 = vld [vmem:[%s1 + $0x74] sm:$0xf]
  %v52 = vld [vmem:[%s1 + $0x78] sm:$0xf]
  %v53 = vld [vmem:[%s1 + $0x7c] sm:$0xf]
  %v54 = vld [vmem:[%s1 + $0x80] sm:$0xf]
  %v55 = vld [vmem:[%s1 + $0x84] sm:$0xf]
  %v56 = vld [vmem:[%s1 + $0x88] sm:$0xf]
  %v57 = vld [vmem:[%s1 + $0x8c] sm:$0xf]
  %v58 = vld [vmem:[%s1 + $0x90] sm:$0xf]
  %v59 = vld [vmem:[%s1 + $0x94] sm:$0xf]
  %v60 = vld [vmem:[%s1 + $0x98] sm:$0xf]
  %v61 = vld [vmem:[%s1 + $0x9c] sm:$0xf]
  %v62 = vld [vmem:[%s1 + $0xa0] sm:$0xf]
  %v63 = vld [vmem:[%s1 + $0xa4] sm:$0xf]
  %v64 = vld [vmem:[%s1 + $0xa8] sm:$0xf]
  %v65 = vld [vmem:[%s1 + $0xac] sm:$0xf]
  %v66 = vld [vmem:[%s1 + $0xb0] sm:$0xf]
  %v67 = vld [vmem:[%s1 + $0xb4] sm:$0xf]
  %v68 = vld [vmem:[%s1 + $0xb8] sm:$0xf]
  %v69 = vld [vmem:[%s1 + $0xbc] sm:$0xf]
  %v70 = vld [vmem:[%s1 + $0xc0] sm:$0xf]
  %v71 = vld [vmem:[%s1 + $0xc4] sm:$0xf]
  %v72 = vld [vmem:[%s1 + $0xc8] sm:$0xf]
  %v73 = vld [vmem:[%s1 + $0xcc] sm:$0xf]
  %v74 = vld [vmem:[%s1 + $0xd0] sm:$0xf]
  %v75 = vld [vmem:[%s1 + $0xd4] sm:$0xf]
  %v76 = vld [vmem:[%s1 + $0xd8] sm:$0xf]
  %v77 = vld [vmem:[%s1 + $0xdc] sm:$0xf]
  %v78 = vld [vmem:[%s1 + $0xe0] sm:$0xf]
  %v79 = vld [vmem:[%s1 + $0xe4] sm:$0xf]
  %v80 = vld [vmem:[%s1 + $0xe8] sm:$0xf]
  %v81 = vld [vmem:[%s1 + $0xec] sm:$0xf]
  %v82 = vld [vmem:[%s1 + $0xf0] sm:$0xf]
  %v83 = vld [vmem:[%s1 + $0xf4] sm:$0xf]
  %v84 = vld [vmem:[%s1 + $0xf8] sm:$0xf]
  %v85 = vld [vmem:[%s1 + $0xfc] sm:$0xf]
  %v86 = vld [vmem:[%s2] sm:$0x1]
  %v88 = vperm.slane %v86, 0
  %v98 = vunpack.c.l.b16 %v14
  %v99 = vunpack.c.h.b16 %v14
  %v100 = vunpack.c.l.b16 %v15
  %v101 = vunpack.c.h.b16 %v15
  %v102 = vunpack.c.l.b16 %v16
  %v103 = vunpack.c.h.b16 %v16
  %v104 = vunpack.c.l.b16 %v17
  %v105 = vunpack.c.h.b16 %v17
  %v106 = vunpack.c.l.b16 %v18
  %v107 = vunpack.c.h.b16 %v18
  %v108 = vunpack.c.l.b16 %v19
  %v109 = vunpack.c.h.b16 %v19
  %v110 = vunpack.c.l.b16 %v20
  %v111 = vunpack.c.h.b16 %v20
  %v112 = vunpack.c.l.b16 %v21
  %v113 = vunpack.c.h.b16 %v21
  %v114 = vpack.c.b16 %v102, %v98
  %v115 = vpack.c.b16 %v103, %v99
  %v116 = vpack.c.b16 %v104, %v100
  %v117 = vpack.c.b16 %v105, %v101
  %v118 = vpack.c.b16 %v110, %v106
  %v119 = vpack.c.b16 %v111, %v107
  %v120 = vpack.c.b16 %v112, %v108
  %v121 = vpack.c.b16 %v113, %v109
  %v194 = vunpack.c.l.b16 %v22
  %v195 = vunpack.c.l.b16 %v23
  %v196 = vunpack.c.l.b16 %v24
  %v197 = vunpack.c.l.b16 %v25
  %v198 = vunpack.c.l.b16 %v26
  %v199 = vunpack.c.l.b16 %v27
  %v200 = vunpack.c.l.b16 %v28
  %v201 = vunpack.c.l.b16 %v29
  %v202 = vunpack.c.l.b16 %v30
  %v203 = vunpack.c.l.b16 %v31
  %v204 = vunpack.c.l.b16 %v32
  %v205 = vunpack.c.l.b16 %v33
  %v206 = vunpack.c.l.b16 %v34
  %v207 = vunpack.c.l.b16 %v35
  %v208 = vunpack.c.l.b16 %v36
  %v209 = vunpack.c.l.b16 %v37
  %v210 = vunpack.c.l.b16 %v38
  %v211 = vunpack.c.l.b16 %v39
  %v212 = vunpack.c.l.b16 %v40
  %v213 = vunpack.c.l.b16 %v41
  %v214 = vunpack.c.l.b16 %v42
  %v215 = vunpack.c.l.b16 %v43
  %v216 = vunpack.c.l.b16 %v44
  %v217 = vunpack.c.l.b16 %v45
  %v218 = vunpack.c.l.b16 %v46
  %v219 = vunpack.c.l.b16 %v47
  %v220 = vunpack.c.l.b16 %v48
  %v221 = vunpack.c.l.b16 %v49
  %v222 = vunpack.c.l.b16 %v50
  %v223 = vunpack.c.l.b16 %v51
  %v224 = vunpack.c.l.b16 %v52
  %v225 = vunpack.c.l.b16 %v53
  %v226 = vunpack.c.l.b16 %v54
  %v227 = vunpack.c.l.b16 %v55
  %v228 = vunpack.c.l.b16 %v56
  %v229 = vunpack.c.l.b16 %v57
  %v230 = vunpack.c.l.b16 %v58
  %v231 = vunpack.c.l.b16 %v59
  %v232 = vunpack.c.l.b16 %v60
  %v233 = vunpack.c.l.b16 %v61
  %v234 = vunpack.c.l.b16 %v62
  %v235 = vunpack.c.l.b16 %v63
  %v236 = vunpack.c.l.b16 %v64
  %v237 = vunpack.c.l.b16 %v65
  %v238 = vunpack.c.l.b16 %v66
  %v239 = vunpack.c.l.b16 %v67
  %v240 = vunpack.c.l.b16 %v68
  %v241 = vunpack.c.l.b16 %v69
  %v242 = vunpack.c.l.b16 %v70
  %v243 = vunpack.c.l.b16 %v71
  %v244 = vunpack.c.l.b16 %v72
  %v245 = vunpack.c.l.b16 %v73
  %v246 = vunpack.c.l.b16 %v74
  %v247 = vunpack.c.l.b16 %v75
  %v248 = vunpack.c.l.b16 %v76
  %v249 = vunpack.c.l.b16 %v77
  %v250 = vunpack.c.l.b16 %v78
  %v251 = vunpack.c.l.b16 %v79
  %v252 = vunpack.c.l.b16 %v80
  %v253 = vunpack.c.l.b16 %v81
  %v254 = vunpack.c.l.b16 %v82
  %v255 = vunpack.c.l.b16 %v83
  %v256 = vunpack.c.l.b16 %v84
  %v257 = vunpack.c.l.b16 %v85
  %v258 = vpack.c.b16 %v195, %v194
  %v259 = vpack.c.b16 %v197, %v196
  %v260 = vpack.c.b16 %v199, %v198
  %v261 = vpack.c.b16 %v201, %v200
  %v262 = vpack.c.b16 %v203, %v202
  %v263 = vpack.c.b16 %v205, %v204
  %v264 = vpack.c.b16 %v207, %v206
  %v265 = vpack.c.b16 %v209, %v208
  %v266 = vpack.c.b16 %v211, %v210
  %v267 = vpack.c.b16 %v213, %v212
  %v268 = vpack.c.b16 %v215, %v214
  %v269 = vpack.c.b16 %v217, %v216
  %v270 = vpack.c.b16 %v219, %v218
  %v271 = vpack.c.b16 %v221, %v220
  %v272 = vpack.c.b16 %v223, %v222
  %v273 = vpack.c.b16 %v225, %v224
  %v274 = vpack.c.b16 %v227, %v226
  %v275 = vpack.c.b16 %v229, %v228
  %v276 = vpack.c.b16 %v231, %v230
  %v277 = vpack.c.b16 %v233, %v232
  %v278 = vpack.c.b16 %v235, %v234
  %v279 = vpack.c.b16 %v237, %v236
  %v280 = vpack.c.b16 %v239, %v238
  %v281 = vpack.c.b16 %v241, %v240
  %v282 = vpack.c.b16 %v243, %v242
  %v283 = vpack.c.b16 %v245, %v244
  %v284 = vpack.c.b16 %v247, %v246
  %v285 = vpack.c.b16 %v249, %v248
  %v286 = vpack.c.b16 %v251, %v250
  %v287 = vpack.c.b16 %v253, %v252
  %v288 = vpack.c.b16 %v255, %v254
  %v289 = vpack.c.b16 %v257, %v256
  %322 = vmatpush.bf16.msra.mxu0 %v265
  %323 = vmatpush.bf16.msra.mxu0 %v264
  %324 = vmatpush.bf16.msra.mxu0 %v263
  %325 = vmatpush.bf16.msra.mxu0 %v262
  %326 = vmatpush.bf16.msra.mxu0 %v261
  %327 = vmatpush.bf16.msra.mxu0 %v260
  %328 = vmatpush.bf16.msra.mxu0 %v259
  %329 = vmatpush.bf16.msra.mxu0 %v258
  %330 = vmatmul.bf16.gmra.mxu0 %v114
  %v331 = vpop.f32.mrf.mxu0
  %v332 = vadd.f32 %v88, %v331
  %v333 = vpop.f32.mrf.mxu0
  %v334 = vadd.f32 %v88, %v333
  %335 = vmatmul.bf16.gmra.mxu0 %v118
  %v336 = vpop.f32.mrf.mxu0
  %v337 = vadd.f32 %v88, %v336
  %v338 = vpop.f32.mrf.mxu0
  %v339 = vadd.f32 %v88, %v338
  %340 = vdwg.mxu0
  %341 = vmatpush.bf16.msra.mxu0 %v273
  %342 = vmatpush.bf16.msra.mxu0 %v272
  %343 = vmatpush.bf16.msra.mxu0 %v271
  %344 = vmatpush.bf16.msra.mxu0 %v270
  %345 = vmatpush.bf16.msra.mxu0 %v269
  %346 = vmatpush.bf16.msra.mxu0 %v268
  %347 = vmatpush.bf16.msra.mxu0 %v267
  %348 = vmatpush.bf16.msra.mxu0 %v266
  %349 = vmatmul.bf16.gmra.mxu0 %v115
  %v350 = vpop.f32.mrf.mxu0
  %v351 = vadd.f32 %v332, %v350
  %v352 = vpop.f32.mrf.mxu0
  %v353 = vadd.f32 %v334, %v352
  %354 = vmatmul.bf16.gmra.mxu0 %v119
  %v355 = vpop.f32.mrf.mxu0
  %v356 = vadd.f32 %v337, %v355
  %v357 = vpop.f32.mrf.mxu0
  %v358 = vadd.f32 %v339, %v357
  %359 = vdwg.mxu0
  %360 = vmatpush.bf16.msra.mxu0 %v281
  %361 = vmatpush.bf16.msra.mxu0 %v280
  %362 = vmatpush.bf16.msra.mxu0 %v279
  %363 = vmatpush.bf16.msra.mxu0 %v278
  %364 = vmatpush.bf16.msra.mxu0 %v277
  %365 = vmatpush.bf16.msra.mxu0 %v276
  %366 = vmatpush.bf16.msra.mxu0 %v275
  %367 = vmatpush.bf16.msra.mxu0 %v274
  %368 = vmatmul.bf16.gmra.mxu0 %v116
  %v369 = vpop.f32.mrf.mxu0
  %v370 = vadd.f32 %v351, %v369
  %v371 = vpop.f32.mrf.mxu0
  %v372 = vadd.f32 %v353, %v371
  %373 = vmatmul.bf16.gmra.mxu0 %v120
  %v374 = vpop.f32.mrf.mxu0
  %v375 = vadd.f32 %v356, %v374
  %v376 = vpop.f32.mrf.mxu0
  %v377 = vadd.f32 %v358, %v376
  %378 = vdwg.mxu0
  %379 = vmatpush.bf16.msra.mxu0 %v289
  %380 = vmatpush.bf16.msra.mxu0 %v288
  %381 = vmatpush.bf16.msra.mxu0 %v287
  %382 = vmatpush.bf16.msra.mxu0 %v286
  %383 = vmatpush.bf16.msra.mxu0 %v285
  %384 = vmatpush.bf16.msra.mxu0 %v284
  %385 = vmatpush.bf16.msra.mxu0 %v283
  %386 = vmatpush.bf16.msra.mxu0 %v282
  %387 = vmatmul.bf16.gmra.mxu0 %v117
  %v388 = vpop.f32.mrf.mxu0
  %v389 = vadd.f32 %v370, %v388
  %v390 = vpop.f32.mrf.mxu0
  %v391 = vadd.f32 %v372, %v390
  %392 = vmatmul.bf16.gmra.mxu0 %v121
  %v393 = vpop.f32.mrf.mxu0
  %v394 = vadd.f32 %v375, %v393
  %v395 = vpop.f32.mrf.mxu0
  %v396 = vadd.f32 %v377, %v395
  %397 = vdwg.mxu0
  %vm398 = vcmp.gt.f32.partialorder %v389, 0.0
  %vm399 = vcmp.gt.f32.partialorder %v391, 0.0
  %vm400 = vcmp.gt.f32.partialorder %v394, 0.0
  %vm401 = vcmp.gt.f32.partialorder %v396, 0.0
  %v402 = vmul.f32 %v389, 0.2
  %v403 = vmul.f32 %v391, 0.2
  %v404 = vmul.f32 %v394, 0.2
  %v405 = vmul.f32 %v396, 0.2
  %v406 = vsel %vm398, %v389, %v402
  %v407 = vsel %vm399, %v391, %v403
  %v408 = vsel %vm400, %v394, %v404
  %v409 = vsel %vm401, %v396, %v405
  %v410 = vpack.c.bf16 %v406, %v406
  %v411 = vpack.c.bf16 %v407, %v407
  %v412 = vpack.c.bf16 %v408, %v408
  %v413 = vpack.c.bf16 %v409, %v409
  %vm414 = vcmask 519168
  %415 = vst.msk [vmem:[%s3] sm:$0xf] %vm414, %v410
  %416 = vst.msk [vmem:[%s3 + $0x4] sm:$0xf] %vm414, %v411
  %417 = vst.msk [vmem:[%s3 + $0x8] sm:$0xf] %vm414, %v412
  %418 = vst.msk [vmem:[%s3 + $0xc] sm:$0xf] %vm414, %v413
  // Predicated region
  $region14: #{discriminator_forward.7} parent=0 // pred_check
    _
  $region15: #{discriminator_forward.7} parent=0 // pred_check_branch
    %420 = sbr.rel (0) target = $region17
  $region16: #{discriminator_forward.7} parent=0 // pred_region
    _
  $region17: #{discriminator_forward.7} parent=0 // pred_fallthru
    _
  // Predicated region
  $region18: #{discriminator_forward.7} parent=0 // pred_check
    _
  $region19: #{discriminator_forward.7} parent=0 // pred_check_branch
    %422 = sbr.rel (0) target = $region21
  $region20: #{discriminator_forward.7} parent=0 // pred_region
    _
  $region21: #{discriminator_forward.7} parent=0 // pred_fallthru
    _

// kernel: discriminator_forward.8
$region0: #{discriminator_forward.8}
  #allocation0 [shape = 'u32[]', space=smem, size = 0x4, offset = 0x4, fixed_abs, tag = 'smem constant byte address 0x4 - core index']
  #allocation1 [shape = 'u32[72,128]{1,0:T(1,128)}', space=vmem, size = 0x9000, scoped, tag = 'internal scratch']
  %s0 = inlined_call_operand.vmem [shape: bf16[8,1024], index: 0, kind: input, shape index: {}]
  %s1 = inlined_call_operand.vmem [shape: bf16[1024,128], index: 1, kind: input, shape index: {}]
  %s2 = inlined_call_operand.vmem [shape: f32[1,128], index: 2, kind: input, shape index: {}]
  %s3 = inlined_call_operand.vmem [shape: bf16[8,128], index: 3, kind: output, shape index: {}]
  %s4 = sld [smem:[#allocation0]]
  $region22: #{discriminator_forward.8} parent=0
    _
  %s6 = ssub.s32 1, %s4
  %s7 = scalar_select 0, %s6, %s4
  // Predicated region
  $region2: #{discriminator_forward.8} parent=0 // pred_check
    _
  $region3: #{discriminator_forward.8} parent=0 // pred_check_branch
    %9 = sbr.rel (0) target = $region5
  $region4: #{discriminator_forward.8} parent=0 // pred_region
    _
  $region5: #{discriminator_forward.8} parent=0 // pred_fallthru
    _
  // Predicated region
  $region6: #{discriminator_forward.8} parent=0 // pred_check
    _
  $region7: #{discriminator_forward.8} parent=0 // pred_check_branch
    %11 = sbr.rel (0) target = $region9
  $region8: #{discriminator_forward.8} parent=0 // pred_region
    _
  $region9: #{discriminator_forward.8} parent=0 // pred_fallthru
    _
  // Predicated region
  $region10: #{discriminator_forward.8} parent=0 // pred_check
    _
  $region11: #{discriminator_forward.8} parent=0 // pred_check_branch
    %13 = sbr.rel (0) target = $region13
  $region12: #{discriminator_forward.8} parent=0 // pred_region
    _
  $region13: #{discriminator_forward.8} parent=0 // pred_fallthru
    _
  %v14 = vld [vmem:[%s0] sm:$0xff]
  %v15 = vld [vmem:[%s0 + $0x8] sm:$0xff]
  %v16 = vld [vmem:[%s0 + $0x10] sm:$0xff]
  %v17 = vld [vmem:[%s0 + $0x18] sm:$0xff]
  %v18 = vld [vmem:[%s1] sm:$0xf]
  %v19 = vld [vmem:[%s1 + $0x4] sm:$0xf]
  %v20 = vld [vmem:[%s1 + $0x8] sm:$0xf]
  %v21 = vld [vmem:[%s1 + $0xc] sm:$0xf]
  %v22 = vld [vmem:[%s1 + $0x10] sm:$0xf]
  %v23 = vld [vmem:[%s1 + $0x14] sm:$0xf]
  %v24 = vld [vmem:[%s1 + $0x18] sm:$0xf]
  %v25 = vld [vmem:[%s1 + $0x1c] sm:$0xf]
  %v26 = vld [vmem:[%s1 + $0x20] sm:$0xf]
  %v27 = vld [vmem:[%s1 + $0x24] sm:$0xf]
  %v28 = vld [vmem:[%s1 + $0x28] sm:$0xf]
  %v29 = vld [vmem:[%s1 + $0x2c] sm:$0xf]
  %v30 = vld [vmem:[%s1 + $0x30] sm:$0xf]
  %v31 = vld [vmem:[%s1 + $0x34] sm:$0xf]
  %v32 = vld [vmem:[%s1 + $0x38] sm:$0xf]
  %v33 = vld [vmem:[%s1 + $0x3c] sm:$0xf]
  %v34 = vld [vmem:[%s1 + $0x40] sm:$0xf]
  %v35 = vld [vmem:[%s1 + $0x44] sm:$0xf]
  %v36 = vld [vmem:[%s1 + $0x48] sm:$0xf]
  %v37 = vld [vmem:[%s1 + $0x4c] sm:$0xf]
  %v38 = vld [vmem:[%s1 + $0x50] sm:$0xf]
  %v39 = vld [vmem:[%s1 + $0x54] sm:$0xf]
  %v40 = vld [vmem:[%s1 + $0x58] sm:$0xf]
  %v41 = vld [vmem:[%s1 + $0x5c] sm:$0xf]
  %v42 = vld [vmem:[%s1 + $0x60] sm:$0xf]
  %v43 = vld [vmem:[%s1 + $0x64] sm:$0xf]
  %v44 = vld [vmem:[%s1 + $0x68] sm:$0xf]
  %v45 = vld [vmem:[%s1 + $0x6c] sm:$0xf]
  %v46 = vld [vmem:[%s1 + $0x70] sm:$0xf]
  %v47 = vld [vmem:[%s1 + $0x74] sm:$0xf]
  %v48 = vld [vmem:[%s1 + $0x78] sm:$0xf]
  %v49 = vld [vmem:[%s1 + $0x7c] sm:$0xf]
  %v50 = vld [vmem:[%s1 + $0x80] sm:$0xf]
  %v51 = vld [vmem:[%s1 + $0x84] sm:$0xf]
  %v52 = vld [vmem:[%s1 + $0x88] sm:$0xf]
  %v53 = vld [vmem:[%s1 + $0x8c] sm:$0xf]
  %v54 = vld [vmem:[%s1 + $0x90] sm:$0xf]
  %v55 = vld [vmem:[%s1 + $0x94] sm:$0xf]
  %v56 = vld [vmem:[%s1 + $0x98] sm:$0xf]
  %v57 = vld [vmem:[%s1 + $0x9c] sm:$0xf]
  %v58 = vld [vmem:[%s1 + $0xa0] sm:$0xf]
  %v59 = vld [vmem:[%s1 + $0xa4] sm:$0xf]
  %v60 = vld [vmem:[%s1 + $0xa8] sm:$0xf]
  %v61 = vld [vmem:[%s1 + $0xac] sm:$0xf]
  %v62 = vld [vmem:[%s1 + $0xb0] sm:$0xf]
  %v63 = vld [vmem:[%s1 + $0xb4] sm:$0xf]
  %v64 = vld [vmem:[%s1 + $0xb8] sm:$0xf]
  %v65 = vld [vmem:[%s1 + $0xbc] sm:$0xf]
  %v66 = vld [vmem:[%s1 + $0xc0] sm:$0xf]
  %v67 = vld [vmem:[%s1 + $0xc4] sm:$0xf]
  %v68 = vld [vmem:[%s1 + $0xc8] sm:$0xf]
  %v69 = vld [vmem:[%s1 + $0xcc] sm:$0xf]
  %v70 = vld [vmem:[%s1 + $0xd0] sm:$0xf]
  %v71 = vld [vmem:[%s1 + $0xd4] sm:$0xf]
  %v72 = vld [vmem:[%s1 + $0xd8] sm:$0xf]
  %v73 = vld [vmem:[%s1 + $0xdc] sm:$0xf]
  %v74 = vld [vmem:[%s1 + $0xe0] sm:$0xf]
  %v75 = vld [vmem:[%s1 + $0xe4] sm:$0xf]
  %v76 = vld [vmem:[%s1 + $0xe8] sm:$0xf]
  %v77 = vld [vmem:[%s1 + $0xec] sm:$0xf]
  %v78 = vld [vmem:[%s1 + $0xf0] sm:$0xf]
  %v79 = vld [vmem:[%s1 + $0xf4] sm:$0xf]
  %v80 = vld [vmem:[%s1 + $0xf8] sm:$0xf]
  %v81 = vld [vmem:[%s1 + $0xfc] sm:$0xf]
  %v82 = vld [vmem:[%s1 + $0x100] sm:$0xf]
  %v83 = vld [vmem:[%s1 + $0x104] sm:$0xf]
  %v84 = vld [vmem:[%s1 + $0x108] sm:$0xf]
  %v85 = vld [vmem:[%s1 + $0x10c] sm:$0xf]
  %v86 = vld [vmem:[%s1 + $0x110] sm:$0xf]
  %v87 = vld [vmem:[%s1 + $0x114] sm:$0xf]
  %v88 = vld [vmem:[%s1 + $0x118] sm:$0xf]
  %v89 = vld [vmem:[%s1 + $0x11c] sm:$0xf]
  %v90 = vld [vmem:[%s1 + $0x120] sm:$0xf]
  %v91 = vld [vmem:[%s1 + $0x124] sm:$0xf]
  %v92 = vld [vmem:[%s1 + $0x128] sm:$0xf]
  %v93 = vld [vmem:[%s1 + $0x12c] sm:$0xf]
  %v94 = vld [vmem:[%s1 + $0x130] sm:$0xf]
  %v95 = vld [vmem:[%s1 + $0x134] sm:$0xf]
  %v96 = vld [vmem:[%s1 + $0x138] sm:$0xf]
  %v97 = vld [vmem:[%s1 + $0x13c] sm:$0xf]
  %v98 = vld [vmem:[%s1 + $0x140] sm:$0xf]
  %v99 = vld [vmem:[%s1 + $0x144] sm:$0xf]
  %v100 = vld [vmem:[%s1 + $0x148] sm:$0xf]
  %v101 = vld [vmem:[%s1 + $0x14c] sm:$0xf]
  %v102 = vld [vmem:[%s1 + $0x150] sm:$0xf]
  %v103 = vld [vmem:[%s1 + $0x154] sm:$0xf]
  %v104 = vld [vmem:[%s1 + $0x158] sm:$0xf]
  %v105 = vld [vmem:[%s1 + $0x15c] sm:$0xf]
  %v106 = vld [vmem:[%s1 + $0x160] sm:$0xf]
  %v107 = vld [vmem:[%s1 + $0x164] sm:$0xf]
  %v108 = vld [vmem:[%s1 + $0x168] sm:$0xf]
  %v109 = vld [vmem:[%s1 + $0x16c] sm:$0xf]
  %v110 = vld [vmem:[%s1 + $0x170] sm:$0xf]
  %v111 = vld [vmem:[%s1 + $0x174] sm:$0xf]
  %v112 = vld [vmem:[%s1 + $0x178] sm:$0xf]
  %v113 = vld [vmem:[%s1 + $0x17c] sm:$0xf]
  %v114 = vld [vmem:[%s1 + $0x180] sm:$0xf]
  %v115 = vld [vmem:[%s1 + $0x184] sm:$0xf]
  %v116 = vld [vmem:[%s1 + $0x188] sm:$0xf]
  %v117 = vld [vmem:[%s1 + $0x18c] sm:$0xf]
  %v118 = vld [vmem:[%s1 + $0x190] sm:$0xf]
  %v119 = vld [vmem:[%s1 + $0x194] sm:$0xf]
  %v120 = vld [vmem:[%s1 + $0x198] sm:$0xf]
  %v121 = vld [vmem:[%s1 + $0x19c] sm:$0xf]
  %v122 = vld [vmem:[%s1 + $0x1a0] sm:$0xf]
  %v123 = vld [vmem:[%s1 + $0x1a4] sm:$0xf]
  %v124 = vld [vmem:[%s1 + $0x1a8] sm:$0xf]
  %v125 = vld [vmem:[%s1 + $0x1ac] sm:$0xf]
  %v126 = vld [vmem:[%s1 + $0x1b0] sm:$0xf]
  %v127 = vld [vmem:[%s1 + $0x1b4] sm:$0xf]
  %v128 = vld [vmem:[%s1 + $0x1b8] sm:$0xf]
  %v129 = vld [vmem:[%s1 + $0x1bc] sm:$0xf]
  %v130 = vld [vmem:[%s1 + $0x1c0] sm:$0xf]
  %v131 = vld [vmem:[%s1 + $0x1c4] sm:$0xf]
  %v132 = vld [vmem:[%s1 + $0x1c8] sm:$0xf]
  %v133 = vld [vmem:[%s1 + $0x1cc] sm:$0xf]
  %v134 = vld [vmem:[%s1 + $0x1d0] sm:$0xf]
  %v135 = vld [vmem:[%s1 + $0x1d4] sm:$0xf]
  %v136 = vld [vmem:[%s1 + $0x1d8] sm:$0xf]
  %v137 = vld [vmem:[%s1 + $0x1dc] sm:$0xf]
  %v138 = vld [vmem:[%s1 + $0x1e0] sm:$0xf]
  %v139 = vld [vmem:[%s1 + $0x1e4] sm:$0xf]
  %v140 = vld [vmem:[%s1 + $0x1e8] sm:$0xf]
  %v141 = vld [vmem:[%s1 + $0x1ec] sm:$0xf]
  %v142 = vld [vmem:[%s1 + $0x1f0] sm:$0xf]
  %v143 = vld [vmem:[%s1 + $0x1f4] sm:$0xf]
  %v144 = vld [vmem:[%s1 + $0x1f8] sm:$0xf]
  %v145 = vld [vmem:[%s1 + $0x1fc] sm:$0xf]
  %v146 = vld [vmem:[%s2] sm:$0x1]
  %v148 = vperm.slane %v146, 0
  %v154 = vunpack.c.l.b16 %v14
  %v155 = vunpack.c.h.b16 %v14
  %v156 = vunpack.c.l.b16 %v15
  %v157 = vunpack.c.h.b16 %v15
  %v158 = vunpack.c.l.b16 %v16
  %v159 = vunpack.c.h.b16 %v16
  %v160 = vunpack.c.l.b16 %v17
  %v161 = vunpack.c.h.b16 %v17
  %v162 = vpack.c.b16 %v154, %v154
  %v163 = vpack.c.b16 %v155, %v155
  %v164 = vpack.c.b16 %v156, %v156
  %v165 = vpack.c.b16 %v157, %v157
  %v166 = vpack.c.b16 %v158, %v158
  %v167 = vpack.c.b16 %v159, %v159
  %v168 = vpack.c.b16 %v160, %v160
  %v169 = vpack.c.b16 %v161, %v161
  %v306 = vunpack.c.l.b16 %v18
  %v307 = vunpack.c.l.b16 %v19
  %v308 = vunpack.c.l.b16 %v20
  %v309 = vunpack.c.l.b16 %v21
  %v310 = vunpack.c.l.b16 %v22
  %v311 = vunpack.c.l.b16 %v23
  %v312 = vunpack.c.l.b16 %v24
  %v313 = vunpack.c.l.b16 %v25
  %v314 = vunpack.c.l.b16 %v26
  %v315 = vunpack.c.l.b16 %v27
  %v316 = vunpack.c.l.b16 %v28
  %v317 = vunpack.c.l.b16 %v29
  %v318 = vunpack.c.l.b16 %v30
  %v319 = vunpack.c.l.b16 %v31
  %v320 = vunpack.c.l.b16 %v32
  %v321 = vunpack.c.l.b16 %v33
  %v322 = vunpack.c.l.b16 %v34
  %v323 = vunpack.c.l.b16 %v35
  %v324 = vunpack.c.l.b16 %v36
  %v325 = vunpack.c.l.b16 %v37
  %v326 = vunpack.c.l.b16 %v38
  %v327 = vunpack.c.l.b16 %v39
  %v328 = vunpack.c.l.b16 %v40
  %v329 = vunpack.c.l.b16 %v41
  %v330 = vunpack.c.l.b16 %v42
  %v331 = vunpack.c.l.b16 %v43
  %v332 = vunpack.c.l.b16 %v44
  %v333 = vunpack.c.l.b16 %v45
  %v334 = vunpack.c.l.b16 %v46
  %v335 = vunpack.c.l.b16 %v47
  %v336 = vunpack.c.l.b16 %v48
  %v337 = vunpack.c.l.b16 %v49
  %v338 = vunpack.c.l.b16 %v50
  %v339 = vunpack.c.l.b16 %v51
  %v340 = vunpack.c.l.b16 %v52
  %v341 = vunpack.c.l.b16 %v53
  %v342 = vunpack.c.l.b16 %v54
  %v343 = vunpack.c.l.b16 %v55
  %v344 = vunpack.c.l.b16 %v56
  %v345 = vunpack.c.l.b16 %v57
  %v346 = vunpack.c.l.b16 %v58
  %v347 = vunpack.c.l.b16 %v59
  %v348 = vunpack.c.l.b16 %v60
  %v349 = vunpack.c.l.b16 %v61
  %v350 = vunpack.c.l.b16 %v62
  %v351 = vunpack.c.l.b16 %v63
  %v352 = vunpack.c.l.b16 %v64
  %v353 = vunpack.c.l.b16 %v65
  %v354 = vunpack.c.l.b16 %v66
  %v355 = vunpack.c.l.b16 %v67
  %v356 = vunpack.c.l.b16 %v68
  %v357 = vunpack.c.l.b16 %v69
  %v358 = vunpack.c.l.b16 %v70
  %v359 = vunpack.c.l.b16 %v71
  %v360 = vunpack.c.l.b16 %v72
  %v361 = vunpack.c.l.b16 %v73
  %v362 = vunpack.c.l.b16 %v74
  %v363 = vunpack.c.l.b16 %v75
  %v364 = vunpack.c.l.b16 %v76
  %v365 = vunpack.c.l.b16 %v77
  %v366 = vunpack.c.l.b16 %v78
  %v367 = vunpack.c.l.b16 %v79
  %v368 = vunpack.c.l.b16 %v80
  %v369 = vunpack.c.l.b16 %v81
  %v370 = vunpack.c.l.b16 %v82
  %v371 = vunpack.c.l.b16 %v83
  %v372 = vunpack.c.l.b16 %v84
  %v373 = vunpack.c.l.b16 %v85
  %v374 = vunpack.c.l.b16 %v86
  %v375 = vunpack.c.l.b16 %v87
  %v376 = vunpack.c.l.b16 %v88
  %v377 = vunpack.c.l.b16 %v89
  %v378 = vunpack.c.l.b16 %v90
  %v379 = vunpack.c.l.b16 %v91
  %v380 = vunpack.c.l.b16 %v92
  %v381 = vunpack.c.l.b16 %v93
  %v382 = vunpack.c.l.b16 %v94
  %v383 = vunpack.c.l.b16 %v95
  %v384 = vunpack.c.l.b16 %v96
  %v385 = vunpack.c.l.b16 %v97
  %v386 = vunpack.c.l.b16 %v98
  %v387 = vunpack.c.l.b16 %v99
  %v388 = vunpack.c.l.b16 %v100
  %v389 = vunpack.c.l.b16 %v101
  %v390 = vunpack.c.l.b16 %v102
  %v391 = vunpack.c.l.b16 %v103
  %v392 = vunpack.c.l.b16 %v104
  %v393 = vunpack.c.l.b16 %v105
  %v394 = vunpack.c.l.b16 %v106
  %v395 = vunpack.c.l.b16 %v107
  %v396 = vunpack.c.l.b16 %v108
  %v397 = vunpack.c.l.b16 %v109
  %v398 = vunpack.c.l.b16 %v110
  %v399 = vunpack.c.l.b16 %v111
  %v400 = vunpack.c.l.b16 %v112
  %v401 = vunpack.c.l.b16 %v113
  %v402 = vunpack.c.l.b16 %v114
  %v403 = vunpack.c.l.b16 %v115
  %v404 = vunpack.c.l.b16 %v116
  %v405 = vunpack.c.l.b16 %v117
  %v406 = vunpack.c.l.b16 %v118
  %v407 = vunpack.c.l.b16 %v119
  %v408 = vunpack.c.l.b16 %v120
  %v409 = vunpack.c.l.b16 %v121
  %v410 = vunpack.c.l.b16 %v122
  %v411 = vunpack.c.l.b16 %v123
  %v412 = vunpack.c.l.b16 %v124
  %v413 = vunpack.c.l.b16 %v125
  %v414 = vunpack.c.l.b16 %v126
  %v415 = vunpack.c.l.b16 %v127
  %v416 = vunpack.c.l.b16 %v128
  %v417 = vunpack.c.l.b16 %v129
  %v418 = vunpack.c.l.b16 %v130
  %v419 = vunpack.c.l.b16 %v131
  %v420 = vunpack.c.l.b16 %v132
  %v421 = vunpack.c.l.b16 %v133
  %v422 = vunpack.c.l.b16 %v134
  %v423 = vunpack.c.l.b16 %v135
  %v424 = vunpack.c.l.b16 %v136
  %v425 = vunpack.c.l.b16 %v137
  %v426 = vunpack.c.l.b16 %v138
  %v427 = vunpack.c.l.b16 %v139
  %v428 = vunpack.c.l.b16 %v140
  %v429 = vunpack.c.l.b16 %v141
  %v430 = vunpack.c.l.b16 %v142
  %v431 = vunpack.c.l.b16 %v143
  %v432 = vunpack.c.l.b16 %v144
  %v433 = vunpack.c.l.b16 %v145
  %v434 = vpack.c.b16 %v307, %v306
  %v435 = vpack.c.b16 %v309, %v308
  %v436 = vpack.c.b16 %v311, %v310
  %v437 = vpack.c.b16 %v313, %v312
  %v438 = vpack.c.b16 %v315, %v314
  %v439 = vpack.c.b16 %v317, %v316
  %v440 = vpack.c.b16 %v319, %v318
  %v441 = vpack.c.b16 %v321, %v320
  %v442 = vpack.c.b16 %v323, %v322
  %v443 = vpack.c.b16 %v325, %v324
  %v444 = vpack.c.b16 %v327, %v326
  %v445 = vpack.c.b16 %v329, %v328
  %v446 = vpack.c.b16 %v331, %v330
  %v447 = vpack.c.b16 %v333, %v332
  %v448 = vpack.c.b16 %v335, %v334
  %v449 = vpack.c.b16 %v337, %v336
  %v450 = vpack.c.b16 %v339, %v338
  %v451 = vpack.c.b16 %v341, %v340
  %v452 = vpack.c.b16 %v343, %v342
  %v453 = vpack.c.b16 %v345, %v344
  %v454 = vpack.c.b16 %v347, %v346
  %v455 = vpack.c.b16 %v349, %v348
  %v456 = vpack.c.b16 %v351, %v350
  %v457 = vpack.c.b16 %v353, %v352
  %v458 = vpack.c.b16 %v355, %v354
  %v459 = vpack.c.b16 %v357, %v356
  %v460 = vpack.c.b16 %v359, %v358
  %v461 = vpack.c.b16 %v361, %v360
  %v462 = vpack.c.b16 %v363, %v362
  %v463 = vpack.c.b16 %v365, %v364
  %v464 = vpack.c.b16 %v367, %v366
  %v465 = vpack.c.b16 %v369, %v368
  %v466 = vpack.c.b16 %v371, %v370
  %v467 = vpack.c.b16 %v373, %v372
  %v468 = vpack.c.b16 %v375, %v374
  %v469 = vpack.c.b16 %v377, %v376
  %v470 = vpack.c.b16 %v379, %v378
  %v471 = vpack.c.b16 %v381, %v380
  %v472 = vpack.c.b16 %v383, %v382
  %v473 = vpack.c.b16 %v385, %v384
  %v474 = vpack.c.b16 %v387, %v386
  %v475 = vpack.c.b16 %v389, %v388
  %v476 = vpack.c.b16 %v391, %v390
  %v477 = vpack.c.b16 %v393, %v392
  %v478 = vpack.c.b16 %v395, %v394
  %v479 = vpack.c.b16 %v397, %v396
  %v480 = vpack.c.b16 %v399, %v398
  %v481 = vpack.c.b16 %v401, %v400
  %v482 = vpack.c.b16 %v403, %v402
  %v483 = vpack.c.b16 %v405, %v404
  %v484 = vpack.c.b16 %v407, %v406
  %v485 = vpack.c.b16 %v409, %v408
  %v486 = vpack.c.b16 %v411, %v410
  %v487 = vpack.c.b16 %v413, %v412
  %v488 = vpack.c.b16 %v415, %v414
  %v489 = vpack.c.b16 %v417, %v416
  %v490 = vpack.c.b16 %v419, %v418
  %v491 = vpack.c.b16 %v421, %v420
  %v492 = vpack.c.b16 %v423, %v422
  %v493 = vpack.c.b16 %v425, %v424
  %v494 = vpack.c.b16 %v427, %v426
  %v495 = vpack.c.b16 %v429, %v428
  %v496 = vpack.c.b16 %v431, %v430
  %v497 = vpack.c.b16 %v433, %v432
  %562 = vmatpush.bf16.msra.mxu0 %v441
  %563 = vmatpush.bf16.msra.mxu0 %v440
  %564 = vmatpush.bf16.msra.mxu0 %v439
  %565 = vmatpush.bf16.msra.mxu0 %v438
  %566 = vmatpush.bf16.msra.mxu0 %v437
  %567 = vmatpush.bf16.msra.mxu0 %v436
  %568 = vmatpush.bf16.msra.mxu0 %v435
  %569 = vmatpush.bf16.msra.mxu0 %v434
  %570 = vmatmul.bf16.gmra.mxu0 %v162
  %v571 = vpop.f32.mrf.mxu0
  %v572 = vadd.f32 %v148, %v571
  %v573 = vpop.f32.mrf.mxu0
  %574 = vdwg.mxu0
  %575 = vmatpush.bf16.msra.mxu0 %v449
  %576 = vmatpush.bf16.msra.mxu0 %v448
  %577 = vmatpush.bf16.msra.mxu0 %v447
  %578 = vmatpush.bf16.msra.mxu0 %v446
  %579 = vmatpush.bf16.msra.mxu0 %v445
  %580 = vmatpush.bf16.msra.mxu0 %v444
  %581 = vmatpush.bf16.msra.mxu0 %v443
  %582 = vmatpush.bf16.msra.mxu0 %v442
  %583 = vmatmul.bf16.gmra.mxu0 %v163
  %v584 = vpop.f32.mrf.mxu0
  %v585 = vadd.f32 %v572, %v584
  %v586 = vpop.f32.mrf.mxu0
  %587 = vdwg.mxu0
  %588 = vmatpush.bf16.msra.mxu0 %v457
  %589 = vmatpush.bf16.msra.mxu0 %v456
  %590 = vmatpush.bf16.msra.mxu0 %v455
  %591 = vmatpush.bf16.msra.mxu0 %v454
  %592 = vmatpush.bf16.msra.mxu0 %v453
  %593 = vmatpush.bf16.msra.mxu0 %v452
  %594 = vmatpush.bf16.msra.mxu0 %v451
  %595 = vmatpush.bf16.msra.mxu0 %v450
  %596 = vmatmul.bf16.gmra.mxu0 %v164
  %v597 = vpop.f32.mrf.mxu0
  %v598 = vadd.f32 %v585, %v597
  %v599 = vpop.f32.mrf.mxu0
  %600 = vdwg.mxu0
  %601 = vmatpush.bf16.msra.mxu0 %v465
  %602 = vmatpush.bf16.msra.mxu0 %v464
  %603 = vmatpush.bf16.msra.mxu0 %v463
  %604 = vmatpush.bf16.msra.mxu0 %v462
  %605 = vmatpush.bf16.msra.mxu0 %v461
  %606 = vmatpush.bf16.msra.mxu0 %v460
  %607 = vmatpush.bf16.msra.mxu0 %v459
  %608 = vmatpush.bf16.msra.mxu0 %v458
  %609 = vmatmul.bf16.gmra.mxu0 %v165
  %v610 = vpop.f32.mrf.mxu0
  %v611 = vadd.f32 %v598, %v610
  %v612 = vpop.f32.mrf.mxu0
  %613 = vdwg.mxu0
  %614 = vmatpush.bf16.msra.mxu0 %v473
  %615 = vmatpush.bf16.msra.mxu0 %v472
  %616 = vmatpush.bf16.msra.mxu0 %v471
  %617 = vmatpush.bf16.msra.mxu0 %v470
  %618 = vmatpush.bf16.msra.mxu0 %v469
  %619 = vmatpush.bf16.msra.mxu0 %v468
  %620 = vmatpush.bf16.msra.mxu0 %v467
  %621 = vmatpush.bf16.msra.mxu0 %v466
  %622 = vmatmul.bf16.gmra.mxu0 %v166
  %v623 = vpop.f32.mrf.mxu0
  %v624 = vadd.f32 %v611, %v623
  %v625 = vpop.f32.mrf.mxu0
  %626 = vdwg.mxu0
  %627 = vmatpush.bf16.msra.mxu0 %v481
  %628 = vmatpush.bf16.msra.mxu0 %v480
  %629 = vmatpush.bf16.msra.mxu0 %v479
  %630 = vmatpush.bf16.msra.mxu0 %v478
  %631 = vmatpush.bf16.msra.mxu0 %v477
  %632 = vmatpush.bf16.msra.mxu0 %v476
  %633 = vmatpush.bf16.msra.mxu0 %v475
  %634 = vmatpush.bf16.msra.mxu0 %v474
  %635 = vmatmul.bf16.gmra.mxu0 %v167
  %v636 = vpop.f32.mrf.mxu0
  %v637 = vadd.f32 %v624, %v636
  %v638 = vpop.f32.mrf.mxu0
  %639 = vdwg.mxu0
  %640 = vmatpush.bf16.msra.mxu0 %v489
  %641 = vmatpush.bf16.msra.mxu0 %v488
  %642 = vmatpush.bf16.msra.mxu0 %v487
  %643 = vmatpush.bf16.msra.mxu0 %v486
  %644 = vmatpush.bf16.msra.mxu0 %v485
  %645 = vmatpush.bf16.msra.mxu0 %v484
  %646 = vmatpush.bf16.msra.mxu0 %v483
  %647 = vmatpush.bf16.msra.mxu0 %v482
  %648 = vmatmul.bf16.gmra.mxu0 %v168
  %v649 = vpop.f32.mrf.mxu0
  %v650 = vadd.f32 %v637, %v649
  %v651 = vpop.f32.mrf.mxu0
  %652 = vdwg.mxu0
  %653 = vmatpush.bf16.msra.mxu0 %v497
  %654 = vmatpush.bf16.msra.mxu0 %v496
  %655 = vmatpush.bf16.msra.mxu0 %v495
  %656 = vmatpush.bf16.msra.mxu0 %v494
  %657 = vmatpush.bf16.msra.mxu0 %v493
  %658 = vmatpush.bf16.msra.mxu0 %v492
  %659 = vmatpush.bf16.msra.mxu0 %v491
  %660 = vmatpush.bf16.msra.mxu0 %v490
  %661 = vmatmul.bf16.gmra.mxu0 %v169
  %v662 = vpop.f32.mrf.mxu0
  %v663 = vadd.f32 %v650, %v662
  %v664 = vpop.f32.mrf.mxu0
  %665 = vdwg.mxu0
  %vm666 = vcmp.gt.f32.partialorder %v663, 0.0
  %v667 = vmul.f32 %v663, 0.2
  %v668 = vsel %vm666, %v663, %v667
  %v669 = vpack.c.bf16 %v668, %v668
  %670 = vst [vmem:[%s3] sm:$0xf] %v669
  // Predicated region
  $region14: #{discriminator_forward.8} parent=0 // pred_check
    _
  $region15: #{discriminator_forward.8} parent=0 // pred_check_branch
    %672 = sbr.rel (0) target = $region17
  $region16: #{discriminator_forward.8} parent=0 // pred_region
    _
  $region17: #{discriminator_forward.8} parent=0 // pred_fallthru
    _
  // Predicated region
  $region18: #{discriminator_forward.8} parent=0 // pred_check
    _
  $region19: #{discriminator_forward.8} parent=0 // pred_check_branch
    %674 = sbr.rel (0) target = $region21
  $region20: #{discriminator_forward.8} parent=0 // pred_region
    _
  $region21: #{discriminator_forward.8} parent=0 // pred_fallthru
    _

// kernel: discriminator_forward.9
$region0: #{discriminator_forward.9}
  #allocation0 [shape = 'u32[]', space=smem, size = 0x4, offset = 0x4, fixed_abs, tag = 'smem constant byte address 0x4 - core index']
  #allocation1 [shape = 'u32[72,128]{1,0:T(1,128)}', space=vmem, size = 0x9000, scoped, tag = 'internal scratch']
  %s0 = inlined_call_operand.vmem [shape: bf16[8,1152], index: 0, kind: input, shape index: {}]
  %s1 = inlined_call_operand.vmem [shape: bf16[1152,128], index: 1, kind: input, shape index: {}]
  %s2 = inlined_call_operand.vmem [shape: f32[1,128], index: 2, kind: input, shape index: {}]
  %s3 = inlined_call_operand.vmem [shape: f32[8,128], index: 3, kind: output, shape index: {}]
  %s4 = sld [smem:[#allocation0]]
  $region22: #{discriminator_forward.9} parent=0
    _
  %s6 = ssub.s32 1, %s4
  %s7 = scalar_select 0, %s6, %s4
  // Predicated region
  $region2: #{discriminator_forward.9} parent=0 // pred_check
    _
  $region3: #{discriminator_forward.9} parent=0 // pred_check_branch
    %9 = sbr.rel (0) target = $region5
  $region4: #{discriminator_forward.9} parent=0 // pred_region
    _
  $region5: #{discriminator_forward.9} parent=0 // pred_fallthru
    _
  // Predicated region
  $region6: #{discriminator_forward.9} parent=0 // pred_check
    _
  $region7: #{discriminator_forward.9} parent=0 // pred_check_branch
    %11 = sbr.rel (0) target = $region9
  $region8: #{discriminator_forward.9} parent=0 // pred_region
    _
  $region9: #{discriminator_forward.9} parent=0 // pred_fallthru
    _
  // Predicated region
  $region10: #{discriminator_forward.9} parent=0 // pred_check
    _
  $region11: #{discriminator_forward.9} parent=0 // pred_check_branch
    %13 = sbr.rel (0) target = $region13
  $region12: #{discriminator_forward.9} parent=0 // pred_region
    _
  $region13: #{discriminator_forward.9} parent=0 // pred_fallthru
    _
  %v14 = vld [vmem:[%s0] sm:$0xff]
  %v15 = vld [vmem:[%s0 + $0x8] sm:$0xff]
  %v16 = vld [vmem:[%s0 + $0x10] sm:$0xff]
  %v17 = vld [vmem:[%s0 + $0x18] sm:$0xff]
  %v18 = vld [vmem:[%s0 + $0x20] sm:$0xf]
  %v19 = vld [vmem:[%s1] sm:$0xf]
  %v20 = vld [vmem:[%s1 + $0x4] sm:$0xf]
  %v21 = vld [vmem:[%s1 + $0x8] sm:$0xf]
  %v22 = vld [vmem:[%s1 + $0xc] sm:$0xf]
  %v23 = vld [vmem:[%s1 + $0x10] sm:$0xf]
  %v24 = vld [vmem:[%s1 + $0x14] sm:$0xf]
  %v25 = vld [vmem:[%s1 + $0x18] sm:$0xf]
  %v26 = vld [vmem:[%s1 + $0x1c] sm:$0xf]
  %v27 = vld [vmem:[%s1 + $0x20] sm:$0xf]
  %v28 = vld [vmem:[%s1 + $0x24] sm:$0xf]
  %v29 = vld [vmem:[%s1 + $0x28] sm:$0xf]
  %v30 = vld [vmem:[%s1 + $0x2c] sm:$0xf]
  %v31 = vld [vmem:[%s1 + $0x30] sm:$0xf]
  %v32 = vld [vmem:[%s1 + $0x34] sm:$0xf]
  %v33 = vld [vmem:[%s1 + $0x38] sm:$0xf]
  %v34 = vld [vmem:[%s1 + $0x3c] sm:$0xf]
  %v35 = vld [vmem:[%s1 + $0x40] sm:$0xf]
  %v36 = vld [vmem:[%s1 + $0x44] sm:$0xf]
  %v37 = vld [vmem:[%s1 + $0x48] sm:$0xf]
  %v38 = vld [vmem:[%s1 + $0x4c] sm:$0xf]
  %v39 = vld [vmem:[%s1 + $0x50] sm:$0xf]
  %v40 = vld [vmem:[%s1 + $0x54] sm:$0xf]
  %v41 = vld [vmem:[%s1 + $0x58] sm:$0xf]
  %v42 = vld [vmem:[%s1 + $0x5c] sm:$0xf]
  %v43 = vld [vmem:[%s1 + $0x60] sm:$0xf]
  %v44 = vld [vmem:[%s1 + $0x64] sm:$0xf]
  %v45 = vld [vmem:[%s1 + $0x68] sm:$0xf]
  %v46 = vld [vmem:[%s1 + $0x6c] sm:$0xf]
  %v47 = vld [vmem:[%s1 + $0x70] sm:$0xf]
  %v48 = vld [vmem:[%s1 + $0x74] sm:$0xf]
  %v49 = vld [vmem:[%s1 + $0x78] sm:$0xf]
  %v50 = vld [vmem:[%s1 + $0x7c] sm:$0xf]
  %v51 = vld [vmem:[%s1 + $0x80] sm:$0xf]
  %v52 = vld [vmem:[%s1 + $0x84] sm:$0xf]
  %v53 = vld [vmem:[%s1 + $0x88] sm:$0xf]
  %v54 = vld [vmem:[%s1 + $0x8c] sm:$0xf]
  %v55 = vld [vmem:[%s1 + $0x90] sm:$0xf]
  %v56 = vld [vmem:[%s1 + $0x94] sm:$0xf]
  %v57 = vld [vmem:[%s1 + $0x98] sm:$0xf]
  %v58 = vld [vmem:[%s1 + $0x9c] sm:$0xf]
  %v59 = vld [vmem:[%s1 + $0xa0] sm:$0xf]
  %v60 = vld [vmem:[%s1 + $0xa4] sm:$0xf]
  %v61 = vld [vmem:[%s1 + $0xa8] sm:$0xf]
  %v62 = vld [vmem:[%s1 + $0xac] sm:$0xf]
  %v63 = vld [vmem:[%s1 + $0xb0] sm:$0xf]
  %v64 = vld [vmem:[%s1 + $0xb4] sm:$0xf]
  %v65 = vld [vmem:[%s1 + $0xb8] sm:$0xf]
  %v66 = vld [vmem:[%s1 + $0xbc] sm:$0xf]
  %v67 = vld [vmem:[%s1 + $0xc0] sm:$0xf]
  %v68 = vld [vmem:[%s1 + $0xc4] sm:$0xf]
  %v69 = vld [vmem:[%s1 + $0xc8] sm:$0xf]
  %v70 = vld [vmem:[%s1 + $0xcc] sm:$0xf]
  %v71 = vld [vmem:[%s1 + $0xd0] sm:$0xf]
  %v72 = vld [vmem:[%s1 + $0xd4] sm:$0xf]
  %v73 = vld [vmem:[%s1 + $0xd8] sm:$0xf]
  %v74 = vld [vmem:[%s1 + $0xdc] sm:$0xf]
  %v75 = vld [vmem:[%s1 + $0xe0] sm:$0xf]
  %v76 = vld [vmem:[%s1 + $0xe4] sm:$0xf]
  %v77 = vld [vmem:[%s1 + $0xe8] sm:$0xf]
  %v78 = vld [vmem:[%s1 + $0xec] sm:$0xf]
  %v79 = vld [vmem:[%s1 + $0xf0] sm:$0xf]
  %v80 = vld [vmem:[%s1 + $0xf4] sm:$0xf]
  %v81 = vld [vmem:[%s1 + $0xf8] sm:$0xf]
  %v82 = vld [vmem:[%s1 + $0xfc] sm:$0xf]
  %v83 = vld [vmem:[%s1 + $0x100] sm:$0xf]
  %v84 = vld [vmem:[%s1 + $0x104] sm:$0xf]
  %v85 = vld [vmem:[%s1 + $0x108] sm:$0xf]
  %v86 = vld [vmem:[%s1 + $0x10c] sm:$0xf]
  %v87 = vld [vmem:[%s1 + $0x110] sm:$0xf]
  %v88 = vld [vmem:[%s1 + $0x114] sm:$0xf]
  %v89 = vld [vmem:[%s1 + $0x118] sm:$0xf]
  %v90 = vld [vmem:[%s1 + $0x11c] sm:$0xf]
  %v91 = vld [vmem:[%s1 + $0x120] sm:$0xf]
  %v92 = vld [vmem:[%s1 + $0x124] sm:$0xf]
  %v93 = vld [vmem:[%s1 + $0x128] sm:$0xf]
  %v94 = vld [vmem:[%s1 + $0x12c] sm:$0xf]
  %v95 = vld [vmem:[%s1 + $0x130] sm:$0xf]
  %v96 = vld [vmem:[%s1 + $0x134] sm:$0xf]
  %v97 = vld [vmem:[%s1 + $0x138] sm:$0xf]
  %v98 = vld [vmem:[%s1 + $0x13c] sm:$0xf]
  %v99 = vld [vmem:[%s1 + $0x140] sm:$0xf]
  %v100 = vld [vmem:[%s1 + $0x144] sm:$0xf]
  %v101 = vld [vmem:[%s1 + $0x148] sm:$0xf]
  %v102 = vld [vmem:[%s1 + $0x14c] sm:$0xf]
  %v103 = vld [vmem:[%s1 + $0x150] sm:$0xf]
  %v104 = vld [vmem:[%s1 + $0x154] sm:$0xf]
  %v105 = vld [vmem:[%s1 + $0x158] sm:$0xf]
  %v106 = vld [vmem:[%s1 + $0x15c] sm:$0xf]
  %v107 = vld [vmem:[%s1 + $0x160] sm:$0xf]
  %v108 = vld [vmem:[%s1 + $0x164] sm:$0xf]
  %v109 = vld [vmem:[%s1 + $0x168] sm:$0xf]
  %v110 = vld [vmem:[%s1 + $0x16c] sm:$0xf]
  %v111 = vld [vmem:[%s1 + $0x170] sm:$0xf]
  %v112 = vld [vmem:[%s1 + $0x174] sm:$0xf]
  %v113 = vld [vmem:[%s1 + $0x178] sm:$0xf]
  %v114 = vld [vmem:[%s1 + $0x17c] sm:$0xf]
  %v115 = vld [vmem:[%s1 + $0x180] sm:$0xf]
  %v116 = vld [vmem:[%s1 + $0x184] sm:$0xf]
  %v117 = vld [vmem:[%s1 + $0x188] sm:$0xf]
  %v118 = vld [vmem:[%s1 + $0x18c] sm:$0xf]
  %v119 = vld [vmem:[%s1 + $0x190] sm:$0xf]
  %v120 = vld [vmem:[%s1 + $0x194] sm:$0xf]
  %v121 = vld [vmem:[%s1 + $0x198] sm:$0xf]
  %v122 = vld [vmem:[%s1 + $0x19c] sm:$0xf]
  %v123 = vld [vmem:[%s1 + $0x1a0] sm:$0xf]
  %v124 = vld [vmem:[%s1 + $0x1a4] sm:$0xf]
  %v125 = vld [vmem:[%s1 + $0x1a8] sm:$0xf]
  %v126 = vld [vmem:[%s1 + $0x1ac] sm:$0xf]
  %v127 = vld [vmem:[%s1 + $0x1b0] sm:$0xf]
  %v128 = vld [vmem:[%s1 + $0x1b4] sm:$0xf]
  %v129 = vld [vmem:[%s1 + $0x1b8] sm:$0xf]
  %v130 = vld [vmem:[%s1 + $0x1bc] sm:$0xf]
  %v131 = vld [vmem:[%s1 + $0x1c0] sm:$0xf]
  %v132 = vld [vmem:[%s1 + $0x1c4] sm:$0xf]
  %v133 = vld [vmem:[%s1 + $0x1c8] sm:$0xf]
  %v134 = vld [vmem:[%s1 + $0x1cc] sm:$0xf]
  %v135 = vld [vmem:[%s1 + $0x1d0] sm:$0xf]
  %v136 = vld [vmem:[%s1 + $0x1d4] sm:$0xf]
  %v137 = vld [vmem:[%s1 + $0x1d8] sm:$0xf]
  %v138 = vld [vmem:[%s1 + $0x1dc] sm:$0xf]
  %v139 = vld [vmem:[%s1 + $0x1e0] sm:$0xf]
  %v140 = vld [vmem:[%s1 + $0x1e4] sm:$0xf]
  %v141 = vld [vmem:[%s1 + $0x1e8] sm:$0xf]
  %v142 = vld [vmem:[%s1 + $0x1ec] sm:$0xf]
  %v143 = vld [vmem:[%s1 + $0x1f0] sm:$0xf]
  %v144 = vld [vmem:[%s1 + $0x1f4] sm:$0xf]
  %v145 = vld [vmem:[%s1 + $0x1f8] sm:$0xf]
  %v146 = vld [vmem:[%s1 + $0x1fc] sm:$0xf]
  %v147 = vld [vmem:[%s1 + $0x200] sm:$0xf]
  %v148 = vld [vmem:[%s1 + $0x204] sm:$0xf]
  %v149 = vld [vmem:[%s1 + $0x208] sm:$0xf]
  %v150 = vld [vmem:[%s1 + $0x20c] sm:$0xf]
  %v151 = vld [vmem:[%s1 + $0x210] sm:$0xf]
  %v152 = vld [vmem:[%s1 + $0x214] sm:$0xf]
  %v153 = vld [vmem:[%s1 + $0x218] sm:$0xf]
  %v154 = vld [vmem:[%s1 + $0x21c] sm:$0xf]
  %v155 = vld [vmem:[%s1 + $0x220] sm:$0xf]
  %v156 = vld [vmem:[%s1 + $0x224] sm:$0xf]
  %v157 = vld [vmem:[%s1 + $0x228] sm:$0xf]
  %v158 = vld [vmem:[%s1 + $0x22c] sm:$0xf]
  %v159 = vld [vmem:[%s1 + $0x230] sm:$0xf]
  %v160 = vld [vmem:[%s1 + $0x234] sm:$0xf]
  %v161 = vld [vmem:[%s1 + $0x238] sm:$0xf]
  %v162 = vld [vmem:[%s1 + $0x23c] sm:$0xf]
  %v163 = vld [vmem:[%s2] sm:$0x1]
  %v165 = vperm.slane %v163, 0
  %v172 = vunpack.c.l.b16 %v14
  %v173 = vunpack.c.h.b16 %v14
  %v174 = vunpack.c.l.b16 %v15
  %v175 = vunpack.c.h.b16 %v15
  %v176 = vunpack.c.l.b16 %v16
  %v177 = vunpack.c.h.b16 %v16
  %v178 = vunpack.c.l.b16 %v17
  %v179 = vunpack.c.h.b16 %v17
  %v180 = vunpack.c.l.b16 %v18
  %v181 = vpack.c.b16 %v172, %v172
  %v182 = vpack.c.b16 %v173, %v173
  %v183 = vpack.c.b16 %v174, %v174
  %v184 = vpack.c.b16 %v175, %v175
  %v185 = vpack.c.b16 %v176, %v176
  %v186 = vpack.c.b16 %v177, %v177
  %v187 = vpack.c.b16 %v178, %v178
  %v188 = vpack.c.b16 %v179, %v179
  %v189 = vpack.c.b16 %v180, %v180
  %v343 = vunpack.c.l.b16 %v19
  %v344 = vunpack.c.l.b16 %v20
  %v345 = vunpack.c.l.b16 %v21
  %v346 = vunpack.c.l.b16 %v22
  %v347 = vunpack.c.l.b16 %v23
  %v348 = vunpack.c.l.b16 %v24
  %v349 = vunpack.c.l.b16 %v25
  %v350 = vunpack.c.l.b16 %v26
  %v351 = vunpack.c.l.b16 %v27
  %v352 = vunpack.c.l.b16 %v28
  %v353 = vunpack.c.l.b16 %v29
  %v354 = vunpack.c.l.b16 %v30
  %v355 = vunpack.c.l.b16 %v31
  %v356 = vunpack.c.l.b16 %v32
  %v357 = vunpack.c.l.b16 %v33
  %v358 = vunpack.c.l.b16 %v34
  %v359 = vunpack.c.l.b16 %v35
  %v360 = vunpack.c.l.b16 %v36
  %v361 = vunpack.c.l.b16 %v37
  %v362 = vunpack.c.l.b16 %v38
  %v363 = vunpack.c.l.b16 %v39
  %v364 = vunpack.c.l.b16 %v40
  %v365 = vunpack.c.l.b16 %v41
  %v366 = vunpack.c.l.b16 %v42
  %v367 = vunpack.c.l.b16 %v43
  %v368 = vunpack.c.l.b16 %v44
  %v369 = vunpack.c.l.b16 %v45
  %v370 = vunpack.c.l.b16 %v46
  %v371 = vunpack.c.l.b16 %v47
  %v372 = vunpack.c.l.b16 %v48
  %v373 = vunpack.c.l.b16 %v49
  %v374 = vunpack.c.l.b16 %v50
  %v375 = vunpack.c.l.b16 %v51
  %v376 = vunpack.c.l.b16 %v52
  %v377 = vunpack.c.l.b16 %v53
  %v378 = vunpack.c.l.b16 %v54
  %v379 = vunpack.c.l.b16 %v55
  %v380 = vunpack.c.l.b16 %v56
  %v381 = vunpack.c.l.b16 %v57
  %v382 = vunpack.c.l.b16 %v58
  %v383 = vunpack.c.l.b16 %v59
  %v384 = vunpack.c.l.b16 %v60
  %v385 = vunpack.c.l.b16 %v61
  %v386 = vunpack.c.l.b16 %v62
  %v387 = vunpack.c.l.b16 %v63
  %v388 = vunpack.c.l.b16 %v64
  %v389 = vunpack.c.l.b16 %v65
  %v390 = vunpack.c.l.b16 %v66
  %v391 = vunpack.c.l.b16 %v67
  %v392 = vunpack.c.l.b16 %v68
  %v393 = vunpack.c.l.b16 %v69
  %v394 = vunpack.c.l.b16 %v70
  %v395 = vunpack.c.l.b16 %v71
  %v396 = vunpack.c.l.b16 %v72
  %v397 = vunpack.c.l.b16 %v73
  %v398 = vunpack.c.l.b16 %v74
  %v399 = vunpack.c.l.b16 %v75
  %v400 = vunpack.c.l.b16 %v76
  %v401 = vunpack.c.l.b16 %v77
  %v402 = vunpack.c.l.b16 %v78
  %v403 = vunpack.c.l.b16 %v79
  %v404 = vunpack.c.l.b16 %v80
  %v405 = vunpack.c.l.b16 %v81
  %v406 = vunpack.c.l.b16 %v82
  %v407 = vunpack.c.l.b16 %v83
  %v408 = vunpack.c.l.b16 %v84
  %v409 = vunpack.c.l.b16 %v85
  %v410 = vunpack.c.l.b16 %v86
  %v411 = vunpack.c.l.b16 %v87
  %v412 = vunpack.c.l.b16 %v88
  %v413 = vunpack.c.l.b16 %v89
  %v414 = vunpack.c.l.b16 %v90
  %v415 = vunpack.c.l.b16 %v91
  %v416 = vunpack.c.l.b16 %v92
  %v417 = vunpack.c.l.b16 %v93
  %v418 = vunpack.c.l.b16 %v94
  %v419 = vunpack.c.l.b16 %v95
  %v420 = vunpack.c.l.b16 %v96
  %v421 = vunpack.c.l.b16 %v97
  %v422 = vunpack.c.l.b16 %v98
  %v423 = vunpack.c.l.b16 %v99
  %v424 = vunpack.c.l.b16 %v100
  %v425 = vunpack.c.l.b16 %v101
  %v426 = vunpack.c.l.b16 %v102
  %v427 = vunpack.c.l.b16 %v103
  %v428 = vunpack.c.l.b16 %v104
  %v429 = vunpack.c.l.b16 %v105
  %v430 = vunpack.c.l.b16 %v106
  %v431 = vunpack.c.l.b16 %v107
  %v432 = vunpack.c.l.b16 %v108
  %v433 = vunpack.c.l.b16 %v109
  %v434 = vunpack.c.l.b16 %v110
  %v435 = vunpack.c.l.b16 %v111
  %v436 = vunpack.c.l.b16 %v112
  %v437 = vunpack.c.l.b16 %v113
  %v438 = vunpack.c.l.b16 %v114
  %v439 = vunpack.c.l.b16 %v115
  %v440 = vunpack.c.l.b16 %v116
  %v441 = vunpack.c.l.b16 %v117
  %v442 = vunpack.c.l.b16 %v118
  %v443 = vunpack.c.l.b16 %v119
  %v444 = vunpack.c.l.b16 %v120
  %v445 = vunpack.c.l.b16 %v121
  %v446 = vunpack.c.l.b16 %v122
  %v447 = vunpack.c.l.b16 %v123
  %v448 = vunpack.c.l.b16 %v124
  %v449 = vunpack.c.l.b16 %v125
  %v450 = vunpack.c.l.b16 %v126
  %v451 = vunpack.c.l.b16 %v127
  %v452 = vunpack.c.l.b16 %v128
  %v453 = vunpack.c.l.b16 %v129
  %v454 = vunpack.c.l.b16 %v130
  %v455 = vunpack.c.l.b16 %v131
  %v456 = vunpack.c.l.b16 %v132
  %v457 = vunpack.c.l.b16 %v133
  %v458 = vunpack.c.l.b16 %v134
  %v459 = vunpack.c.l.b16 %v135
  %v460 = vunpack.c.l.b16 %v136
  %v461 = vunpack.c.l.b16 %v137
  %v462 = vunpack.c.l.b16 %v138
  %v463 = vunpack.c.l.b16 %v139
  %v464 = vunpack.c.l.b16 %v140
  %v465 = vunpack.c.l.b16 %v141
  %v466 = vunpack.c.l.b16 %v142
  %v467 = vunpack.c.l.b16 %v143
  %v468 = vunpack.c.l.b16 %v144
  %v469 = vunpack.c.l.b16 %v145
  %v470 = vunpack.c.l.b16 %v146
  %v471 = vunpack.c.l.b16 %v147
  %v472 = vunpack.c.l.b16 %v148
  %v473 = vunpack.c.l.b16 %v149
  %v474 = vunpack.c.l.b16 %v150
  %v475 = vunpack.c.l.b16 %v151
  %v476 = vunpack.c.l.b16 %v152
  %v477 = vunpack.c.l.b16 %v153
  %v478 = vunpack.c.l.b16 %v154
  %v479 = vunpack.c.l.b16 %v155
  %v480 = vunpack.c.l.b16 %v156
  %v481 = vunpack.c.l.b16 %v157
  %v482 = vunpack.c.l.b16 %v158
  %v483 = vunpack.c.l.b16 %v159
  %v484 = vunpack.c.l.b16 %v160
  %v485 = vunpack.c.l.b16 %v161
  %v486 = vunpack.c.l.b16 %v162
  %v487 = vpack.c.b16 %v344, %v343
  %v488 = vpack.c.b16 %v346, %v345
  %v489 = vpack.c.b16 %v348, %v347
  %v490 = vpack.c.b16 %v350, %v349
  %v491 = vpack.c.b16 %v352, %v351
  %v492 = vpack.c.b16 %v354, %v353
  %v493 = vpack.c.b16 %v356, %v355
  %v494 = vpack.c.b16 %v358, %v357
  %v495 = vpack.c.b16 %v360, %v359
  %v496 = vpack.c.b16 %v362, %v361
  %v497 = vpack.c.b16 %v364, %v363
  %v498 = vpack.c.b16 %v366, %v365
  %v499 = vpack.c.b16 %v368, %v367
  %v500 = vpack.c.b16 %v370, %v369
  %v501 = vpack.c.b16 %v372, %v371
  %v502 = vpack.c.b16 %v374, %v373
  %v503 = vpack.c.b16 %v376, %v375
  %v504 = vpack.c.b16 %v378, %v377
  %v505 = vpack.c.b16 %v380, %v379
  %v506 = vpack.c.b16 %v382, %v381
  %v507 = vpack.c.b16 %v384, %v383
  %v508 = vpack.c.b16 %v386, %v385
  %v509 = vpack.c.b16 %v388, %v387
  %v510 = vpack.c.b16 %v390, %v389
  %v511 = vpack.c.b16 %v392, %v391
  %v512 = vpack.c.b16 %v394, %v393
  %v513 = vpack.c.b16 %v396, %v395
  %v514 = vpack.c.b16 %v398, %v397
  %v515 = vpack.c.b16 %v400, %v399
  %v516 = vpack.c.b16 %v402, %v401
  %v517 = vpack.c.b16 %v404, %v403
  %v518 = vpack.c.b16 %v406, %v405
  %v519 = vpack.c.b16 %v408, %v407
  %v520 = vpack.c.b16 %v410, %v409
  %v521 = vpack.c.b16 %v412, %v411
  %v522 = vpack.c.b16 %v414, %v413
  %v523 = vpack.c.b16 %v416, %v415
  %v524 = vpack.c.b16 %v418, %v417
  %v525 = vpack.c.b16 %v420, %v419
  %v526 = vpack.c.b16 %v422, %v421
  %v527 = vpack.c.b16 %v424, %v423
  %v528 = vpack.c.b16 %v426, %v425
  %v529 = vpack.c.b16 %v428, %v427
  %v530 = vpack.c.b16 %v430, %v429
  %v531 = vpack.c.b16 %v432, %v431
  %v532 = vpack.c.b16 %v434, %v433
  %v533 = vpack.c.b16 %v436, %v435
  %v534 = vpack.c.b16 %v438, %v437
  %v535 = vpack.c.b16 %v440, %v439
  %v536 = vpack.c.b16 %v442, %v441
  %v537 = vpack.c.b16 %v444, %v443
  %v538 = vpack.c.b16 %v446, %v445
  %v539 = vpack.c.b16 %v448, %v447
  %v540 = vpack.c.b16 %v450, %v449
  %v541 = vpack.c.b16 %v452, %v451
  %v542 = vpack.c.b16 %v454, %v453
  %v543 = vpack.c.b16 %v456, %v455
  %v544 = vpack.c.b16 %v458, %v457
  %v545 = vpack.c.b16 %v460, %v459
  %v546 = vpack.c.b16 %v462, %v461
  %v547 = vpack.c.b16 %v464, %v463
  %v548 = vpack.c.b16 %v466, %v465
  %v549 = vpack.c.b16 %v468, %v467
  %v550 = vpack.c.b16 %v470, %v469
  %v551 = vpack.c.b16 %v472, %v471
  %v552 = vpack.c.b16 %v474, %v473
  %v553 = vpack.c.b16 %v476, %v475
  %v554 = vpack.c.b16 %v478, %v477
  %v555 = vpack.c.b16 %v480, %v479
  %v556 = vpack.c.b16 %v482, %v481
  %v557 = vpack.c.b16 %v484, %v483
  %v558 = vpack.c.b16 %v486, %v485
  %631 = vmatpush.bf16.msra.mxu0 %v494
  %632 = vmatpush.bf16.msra.mxu0 %v493
  %633 = vmatpush.bf16.msra.mxu0 %v492
  %634 = vmatpush.bf16.msra.mxu0 %v491
  %635 = vmatpush.bf16.msra.mxu0 %v490
  %636 = vmatpush.bf16.msra.mxu0 %v489
  %637 = vmatpush.bf16.msra.mxu0 %v488
  %638 = vmatpush.bf16.msra.mxu0 %v487
  %639 = vmatmul.bf16.gmra.mxu0 %v181
  %v640 = vpop.f32.mrf.mxu0
  %v641 = vadd.f32 %v165, %v640
  %v642 = vpop.f32.mrf.mxu0
  %643 = vdwg.mxu0
  %644 = vmatpush.bf16.msra.mxu0 %v502
  %645 = vmatpush.bf16.msra.mxu0 %v501
  %646 = vmatpush.bf16.msra.mxu0 %v500
  %647 = vmatpush.bf16.msra.mxu0 %v499
  %648 = vmatpush.bf16.msra.mxu0 %v498
  %649 = vmatpush.bf16.msra.mxu0 %v497
  %650 = vmatpush.bf16.msra.mxu0 %v496
  %651 = vmatpush.bf16.msra.mxu0 %v495
  %652 = vmatmul.bf16.gmra.mxu0 %v182
  %v653 = vpop.f32.mrf.mxu0
  %v654 = vadd.f32 %v641, %v653
  %v655 = vpop.f32.mrf.mxu0
  %656 = vdwg.mxu0
  %657 = vmatpush.bf16.msra.mxu0 %v510
  %658 = vmatpush.bf16.msra.mxu0 %v509
  %659 = vmatpush.bf16.msra.mxu0 %v508
  %660 = vmatpush.bf16.msra.mxu0 %v507
  %661 = vmatpush.bf16.msra.mxu0 %v506
  %662 = vmatpush.bf16.msra.mxu0 %v505
  %663 = vmatpush.bf16.msra.mxu0 %v504
  %664 = vmatpush.bf16.msra.mxu0 %v503
  %665 = vmatmul.bf16.gmra.mxu0 %v183
  %v666 = vpop.f32.mrf.mxu0
  %v667 = vadd.f32 %v654, %v666
  %v668 = vpop.f32.mrf.mxu0
  %669 = vdwg.mxu0
  %670 = vmatpush.bf16.msra.mxu0 %v518
  %671 = vmatpush.bf16.msra.mxu0 %v517
  %672 = vmatpush.bf16.msra.mxu0 %v516
  %673 = vmatpush.bf16.msra.mxu0 %v515
  %674 = vmatpush.bf16.msra.mxu0 %v514
  %675 = vmatpush.bf16.msra.mxu0 %v513
  %676 = vmatpush.bf16.msra.mxu0 %v512
  %677 = vmatpush.bf16.msra.mxu0 %v511
  %678 = vmatmul.bf16.gmra.mxu0 %v184
  %v679 = vpop.f32.mrf.mxu0
  %v680 = vadd.f32 %v667, %v679
  %v681 = vpop.f32.mrf.mxu0
  %682 = vdwg.mxu0
  %683 = vmatpush.bf16.msra.mxu0 %v526
  %684 = vmatpush.bf16.msra.mxu0 %v525
  %685 = vmatpush.bf16.msra.mxu0 %v524
  %686 = vmatpush.bf16.msra.mxu0 %v523
  %687 = vmatpush.bf16.msra.mxu0 %v522
  %688 = vmatpush.bf16.msra.mxu0 %v521
  %689 = vmatpush.bf16.msra.mxu0 %v520
  %690 = vmatpush.bf16.msra.mxu0 %v519
  %691 = vmatmul.bf16.gmra.mxu0 %v185
  %v692 = vpop.f32.mrf.mxu0
  %v693 = vadd.f32 %v680, %v692
  %v694 = vpop.f32.mrf.mxu0
  %695 = vdwg.mxu0
  %696 = vmatpush.bf16.msra.mxu0 %v534
  %697 = vmatpush.bf16.msra.mxu0 %v533
  %698 = vmatpush.bf16.msra.mxu0 %v532
  %699 = vmatpush.bf16.msra.mxu0 %v531
  %700 = vmatpush.bf16.msra.mxu0 %v530
  %701 = vmatpush.bf16.msra.mxu0 %v529
  %702 = vmatpush.bf16.msra.mxu0 %v528
  %703 = vmatpush.bf16.msra.mxu0 %v527
  %704 = vmatmul.bf16.gmra.mxu0 %v186
  %v705 = vpop.f32.mrf.mxu0
  %v706 = vadd.f32 %v693, %v705
  %v707 = vpop.f32.mrf.mxu0
  %708 = vdwg.mxu0
  %709 = vmatpush.bf16.msra.mxu0 %v542
  %710 = vmatpush.bf16.msra.mxu0 %v541
  %711 = vmatpush.bf16.msra.mxu0 %v540
  %712 = vmatpush.bf16.msra.mxu0 %v539
  %713 = vmatpush.bf16.msra.mxu0 %v538
  %714 = vmatpush.bf16.msra.mxu0 %v537
  %715 = vmatpush.bf16.msra.mxu0 %v536
  %716 = vmatpush.bf16.msra.mxu0 %v535
  %717 = vmatmul.bf16.gmra.mxu0 %v187
  %v718 = vpop.f32.mrf.mxu0
  %v719 = vadd.f32 %v706, %v718
  %v720 = vpop.f32.mrf.mxu0
  %721 = vdwg.mxu0
  %722 = vmatpush.bf16.msra.mxu0 %v550
  %723 = vmatpush.bf16.msra.mxu0 %v549
  %724 = vmatpush.bf16.msra.mxu0 %v548
  %725 = vmatpush.bf16.msra.mxu0 %v547
  %726 = vmatpush.bf16.msra.mxu0 %v546
  %727 = vmatpush.bf16.msra.mxu0 %v545
  %728 = vmatpush.bf16.msra.mxu0 %v544
  %729 = vmatpush.bf16.msra.mxu0 %v543
  %730 = vmatmul.bf16.gmra.mxu0 %v188
  %v731 = vpop.f32.mrf.mxu0
  %v732 = vadd.f32 %v719, %v731
  %v733 = vpop.f32.mrf.mxu0
  %734 = vdwg.mxu0
  %735 = vmatpush.bf16.msra.mxu0 %v558
  %736 = vmatpush.bf16.msra.mxu0 %v557
  %737 = vmatpush.bf16.msra.mxu0 %v556
  %738 = vmatpush.bf16.msra.mxu0 %v555
  %739 = vmatpush.bf16.msra.mxu0 %v554
  %740 = vmatpush.bf16.msra.mxu0 %v553
  %741 = vmatpush.bf16.msra.mxu0 %v552
  %742 = vmatpush.bf16.msra.mxu0 %v551
  %743 = vmatmul.bf16.gmra.mxu0 %v189
  %v744 = vpop.f32.mrf.mxu0
  %v745 = vadd.f32 %v732, %v744
  %v746 = vpop.f32.mrf.mxu0
  %747 = vdwg.mxu0
  %748 = vst [vmem:[%s3] sm:$0xff] %v745
  // Predicated region
  $region14: #{discriminator_forward.9} parent=0 // pred_check
    _
  $region15: #{discriminator_forward.9} parent=0 // pred_check_branch
    %750 = sbr.rel (0) target = $region17
  $region16: #{discriminator_forward.9} parent=0 // pred_region
    _
  $region17: #{discriminator_forward.9} parent=0 // pred_fallthru
    _
  // Predicated region
  $region18: #{discriminator_forward.9} parent=0 // pred_check
    _
  $region19: #{discriminator_forward.9} parent=0 // pred_check_branch
    %752 = sbr.rel (0) target = $region21
  $region20: #{discriminator_forward.9} parent=0 // pred_region
    _
  $region21: #{discriminator_forward.9} parent=0 // pred_fallthru
    _

</llo_original>
